<compile_context>
chip_gen: v5e
topology: v5e:2x2
jax: 0.10.0
libtpu: 0.0.40
codegen_flags: <defaults>
</compile_context>

<pallas_src>
import jax
import jax.numpy as jnp
import numpy as np
from jax.experimental import pallas as pl
from jax.experimental.pallas import tpu as pltpu

# Keep f32 matmuls at full precision so kernel and pure-JAX reference agree tightly.
jax.config.update("jax_default_matmul_precision", "highest")


def _cdiv(a, b):
    return -(-a // b)


def _make_kernel(tile_nodes, self_is_identity):
    TN = tile_nodes

    def kernel(fb_ref, nb_ref,               # scalar-prefetch: per-node-tile CSR metadata
               xe_ref, dst_ref,              # per-edge-block operands
               w_ref, b_ref, att_ref, xn_ref,
               *rest):
        if self_is_identity:
            out_ref, acc_ref = rest
        else:
            ws_ref, bs_ref, out_ref, acc_ref = rest

        i = pl.program_id(0)   # node tile ("parallel")
        k = pl.program_id(1)   # edge block within this node tile ("arbitrary")

        # ---- init the running-max accumulator on the first edge block ----
        @pl.when(k == 0)
        def _init():
            acc_ref[...] = jnp.full(acc_ref.shape, -jnp.inf, acc_ref.dtype)

        # ---- accumulate: only real edge blocks of this node tile ----
        @pl.when(k < nb_ref[i])
        def _accumulate():
            # fused lin_msg + lin_edge: one MXU matmul, one bias
            m = jnp.dot(xe_ref[...], w_ref[...],
                        preferred_element_type=jnp.float32) + b_ref[...]     # [TE, 128] f32
            # additive attention on the MXU: att is lane-replicated, so every column of
            # `alpha` already equals sum(m * att, -1) -> no cross-lane reduce / broadcast.
            alpha = jnp.dot(m, att_ref[...], preferred_element_type=jnp.float32)
            alpha = jnp.where(alpha > 0, alpha, 0.2 * alpha)                 # leaky_relu(0.2)
            msg = m * alpha                                                  # [TE, 128]

            # segment-max into the node tile (edges are sorted by dst, TN rows unrolled)
            local = dst_ref[...] - i * TN                                    # [TE, 1] int32
            rows = []
            for r in range(TN):                                              # static unroll
                sel = jnp.where(local == r, msg, -jnp.inf)
                rows.append(jnp.max(sel, axis=0, keepdims=True))
            acc_ref[...] = jnp.maximum(acc_ref[...], jnp.concatenate(rows, axis=0))

        # ---- finalize: isolated-node fixup + skip connection, single lane-dense store ----
        @pl.when(k == pl.num_programs(1) - 1)
        def _finalize():
            agg = acc_ref[...]
            agg = jnp.where(agg == -jnp.inf, 0.0, agg)    # nodes w/o in-edges -> 0 (PyG)
            if self_is_identity:
                out_ref[...] = agg + xn_ref[...]          # lin_self == Identity: no matmul
            else:
                out_ref[...] = agg + jnp.dot(
                    xn_ref[...], ws_ref[...],
                    preferred_element_type=jnp.float32) + bs_ref[...]

    return kernel


def general_conv_max_attention(x, edge_index, edge_attr, params, *,
                               tile_nodes=8, tile_edges=256,
                               use_bf16_matmul=False, c_pad=128,
                               vmem_limit_bytes=48 * 1024 * 1024):
    """x: [N, Cin] f32; edge_index: [2, E] int; edge_attr: [E] f32 or None.

    Runs eagerly (not under jit): the data-dependent per-node-tile block counts are
    turned into a concrete grid bound.
    """
    N, c_in = x.shape
    E = edge_index.shape[1]
    c_out = params["w_msg"].shape[1]
    assert c_out <= c_pad and c_in <= c_pad
    TN, TE = tile_nodes, tile_edges
    assert TN % 8 == 0 and TE % 8 == 0
    f32 = jnp.float32

    n_node_tiles = _cdiv(N, TN)
    n_pad = n_node_tiles * TN
    self_is_identity = "w_self" not in params       # GeneralConv: Identity when Cin == Cout
    has_edge_attr = edge_attr is not None           # lin_edge skipped explicitly when None

    # ---------------- CSR preprocessing (wrapper): sort edges by destination ------------
    src = edge_index[0].astype(jnp.int32)
    dst = edge_index[1].astype(jnp.int32)
    order = jnp.argsort(dst)
    src_s = src[order]
    dst_s = dst[order]

    # Fused message operand [x_src | edge_attr]; fused weights/bias (lin_msg (+ lin_edge)).
    x_src = x.astype(f32)[src_s]                          # [E, Cin]  (gather once, wrapper)
    if has_edge_attr:
        ea_s = edge_attr.astype(f32)[order][:, None]      # .unsqueeze(-1)
        xe = jnp.concatenate([x_src, ea_s], axis=1)       # [E, Cin+1]
        w_fused = jnp.concatenate([params["w_msg"], params["w_edge"]], axis=0)
        b_fused = params["b_msg"] + params["b_edge"]
    else:
        xe = x_src
        w_fused = params["w_msg"]
        b_fused = params["b_msg"]
    k_dim = xe.shape[1]

    # Pad edges to whole blocks; padded edges get dst = n_pad so they never match a row.
    n_eblocks = max(_cdiv(E, TE), 1)
    e_pad = n_eblocks * TE
    xe = jnp.pad(xe, ((0, e_pad - E), (0, 0)))
    dst_s = jnp.concatenate([dst_s, jnp.full((e_pad - E,), n_pad, jnp.int32)])

    # Lane-dense padding of the feature dim (Cout -> c_pad = 128).
    w_fused = jnp.pad(w_fused, ((0, 0), (0, c_pad - c_out)))
    b_fused = jnp.pad(b_fused, ((0, 0), (0, c_pad - c_out)))
    att = jnp.pad(params["att"].reshape(1, c_out), ((0, 0), (0, c_pad - c_out)))
    att_rep = jnp.broadcast_to(att.T, (c_pad, c_pad)).astype(f32)   # alpha via the MXU

    # Per-node-tile edge-block offsets/counts (scalar-prefetched CSR metadata).
    tile_lo = jnp.arange(n_node_tiles, dtype=jnp.int32) * TN
    starts = jnp.searchsorted(dst_s, tile_lo, side="left").astype(jnp.int32)
    ends = jnp.searchsorted(dst_s, tile_lo + TN, side="left").astype(jnp.int32)
    first_blk = (starts // TE).astype(jnp.int32)
    n_blk = jnp.where(ends > starts,
                      (ends - 1) // TE - starts // TE + 1, 0).astype(jnp.int32)
    k_max = max(int(jnp.max(n_blk)), 1)

    # Skip-connection operands (kept in f32 for bit-parity of the residual path).
    if self_is_identity:
        xn = jnp.pad(x.astype(f32), ((0, n_pad - N), (0, c_pad - c_in)))
    else:
        xn = jnp.pad(x.astype(f32), ((0, n_pad - N), (0, 0)))
        w_self = jnp.pad(params["w_self"], ((0, 0), (0, c_pad - c_out)))
        b_self = jnp.pad(params["b_self"], ((0, 0), (0, c_pad - c_out)))

    if use_bf16_matmul:   # bf16 MXU operands, f32 accumulation & f32 elementwise math
        xe = xe.astype(jnp.bfloat16)
        w_fused = w_fused.astype(jnp.bfloat16)

    dst_col = dst_s[:, None]                              # [E_pad, 1] int32

    # ---------------- grid / BlockSpecs -------------------------------------------------
    def eblk_map(i, k, fb, nb):      # data-dependent edge-block index (clamped in-bounds)
        return (jnp.minimum(fb[i] + k, n_eblocks - 1), 0)

    def const_map(i, k, fb, nb):
        return (0, 0)

    def node_map(i, k, fb, nb):      # same block across k -> resident / accumulator output
        return (i, 0)

    in_specs = [
        pl.BlockSpec((TE, k_dim), eblk_map),          # fused [x_src | ea] edge block
        pl.BlockSpec((TE, 1), eblk_map),              # sorted dst for this block
        pl.BlockSpec((k_dim, c_pad), const_map),      # fused weight  [W_msg; W_edge]
        pl.BlockSpec((1, c_pad), const_map),          # fused bias    (b_msg + b_edge)
        pl.BlockSpec((c_pad, c_pad), const_map),      # att_msg, lane-replicated
        pl.BlockSpec((TN, xn.shape[1]), node_map),    # x node tile (skip connection)
    ]
    inputs = [xe, dst_col, w_fused, b_fused, att_rep, xn]
    if not self_is_identity:
        in_specs += [pl.BlockSpec((c_in, c_pad), const_map),
                     pl.BlockSpec((1, c_pad), const_map)]
        inputs += [w_self, b_self]

    grid_spec = pltpu.PrefetchScalarGridSpec(
        num_scalar_prefetch=2,
        grid=(n_node_tiles, k_max),
        in_specs=in_specs,
        out_specs=pl.BlockSpec((TN, c_pad), node_map),
        scratch_shapes=[pltpu.VMEM((TN, c_pad), jnp.float32)],   # running max accumulator
    )

    out = pl.pallas_call(
        _make_kernel(TN, self_is_identity),
        out_shape=jax.ShapeDtypeStruct((n_pad, c_pad), jnp.float32),
        grid_spec=grid_spec,
        compiler_params=pltpu.CompilerParams(
            dimension_semantics=("parallel", "arbitrary"),   # node tiles split across TCs on v7x
            vmem_limit_bytes=vmem_limit_bytes,               # sized for v7x's 64 MiB VMEM
        ),
    )(first_blk, n_blk, *inputs)

    return out[:N, :c_out]


def init_params(key, c_in, c_out, edge_dim):
    ks = jax.random.split(key, 4)

    def linear(k, fan_in, fan_out):
        kw, kb = jax.random.split(k)
        bound = 1.0 / np.sqrt(fan_in)
        w = jax.random.uniform(kw, (fan_in, fan_out), jnp.float32, -bound, bound)
        b = jax.random.uniform(kb, (1, fan_out), jnp.float32, -bound, bound)
        return w, b

    p = {}
    p["w_msg"], p["b_msg"] = linear(ks[0], c_in, c_out)
    if edge_dim is not None:
        p["w_edge"], p["b_edge"] = linear(ks[1], edge_dim, c_out)
    p["att"] = 0.1 * jax.random.normal(ks[2], (1, c_out), jnp.float32)   # att_msg (heads=1)
    if c_in != c_out:                       # lin_self == Identity when c_in == c_out
        p["w_self"], p["b_self"] = linear(ks[3], c_in, c_out)
    return p


def reference_forward(x, edge_index, edge_attr, params):
    """Pure-JAX reference of the same math, for a correctness check."""
    src, dst = edge_index[0], edge_index[1]
    m = x[src] @ params["w_msg"] + params["b_msg"]
    if edge_attr is not None:
        m = m + edge_attr[:, None] @ params["w_edge"] + params["b_edge"]
    alpha = jnp.sum(m * params["att"], axis=-1, keepdims=True)
    alpha = jnp.where(alpha > 0, alpha, 0.2 * alpha)
    msg = m * alpha
    N, c_out = x.shape[0], m.shape[1]
    agg = jnp.full((N, c_out), -jnp.inf, jnp.float32).at[dst].max(msg)
    deg = jnp.zeros((N,), jnp.float32).at[dst].add(1.0)
    agg = jnp.where(deg[:, None] > 0, agg, 0.0)
    if "w_self" in params:
        return agg + x @ params["w_self"] + params["b_self"]
    return agg + x


if __name__ == "__main__":
    key = jax.random.PRNGKey(0)

    # ---- Config A: Cin != Cout (real lin_self), edge_attr present, f32 MXU path -------
    N, E, C_IN, C_OUT = 16, 48, 8, 16
    kx, ksrc, kdst, kea, kp, key = jax.random.split(key, 6)
    x = jax.random.normal(kx, (N, C_IN), jnp.float32)
    src = jax.random.randint(ksrc, (E,), 0, N, jnp.int32)
    dst = jax.random.randint(kdst, (E,), 0, N - 1, jnp.int32)   # node N-1 has no in-edges
    edge_index = jnp.stack([src, dst], axis=0)
    edge_attr = jax.random.normal(kea, (E,), jnp.float32)
    params = init_params(kp, C_IN, C_OUT, edge_dim=1)

    out = general_conv_max_attention(x, edge_index, edge_attr, params,
                                     tile_nodes=8, tile_edges=16)
    out = jax.block_until_ready(out)
    ref = reference_forward(x, edge_index, edge_attr, params)
    assert out.shape == (N, C_OUT)
    np.testing.assert_allclose(np.asarray(out), np.asarray(ref), rtol=1e-4, atol=1e-4)

    # ---- Config B: Cin == Cout (lin_self Identity, skipped), no edge_attr, bf16 MXU ----
    N2, E2, C2 = 24, 40, 16
    kx2, ksrc2, kdst2, kp2, key = jax.random.split(key, 5)
    x2 = jax.random.normal(kx2, (N2, C2), jnp.float32)
    src2 = jax.random.randint(ksrc2, (E2,), 0, N2, jnp.int32)
    dst2 = jax.random.randint(kdst2, (E2,), 0, N2 - 2, jnp.int32)  # last 2 nodes isolated
    edge_index2 = jnp.stack([src2, dst2], axis=0)
    params2 = init_params(kp2, C2, C2, edge_dim=None)

    out2 = general_conv_max_attention(x2, edge_index2, None, params2,
                                      tile_nodes=8, tile_edges=16,
                                      use_bf16_matmul=True)
    out2 = jax.block_until_ready(out2)
    ref2 = reference_forward(x2, edge_index2, None, params2)
    assert out2.shape == (N2, C2)
    np.testing.assert_allclose(np.asarray(out2), np.asarray(ref2), rtol=5e-2, atol=5e-2)

    print("KERNEL_OK")
</pallas_src>

<mosaic_0001>
module attributes {stable_mosaic.version = 11 : i64} {
  func.func @kernel(%arg0: i32, %arg1: i32, %arg2: memref<2xi32, #tpu.memory_space<smem>>, %arg3: memref<2xi32, #tpu.memory_space<smem>>, %arg4: memref<16x9xf32, #tpu.memory_space<vmem>>, %arg5: memref<16x1xi32, #tpu.memory_space<vmem>>, %arg6: memref<9x128xf32, #tpu.memory_space<vmem>>, %arg7: memref<1x128xf32, #tpu.memory_space<vmem>>, %arg8: memref<128x128xf32, #tpu.memory_space<vmem>>, %arg9: memref<8x8xf32, #tpu.memory_space<vmem>>, %arg10: memref<8x128xf32, #tpu.memory_space<vmem>>, %arg11: memref<1x128xf32, #tpu.memory_space<vmem>>, %arg12: memref<8x128xf32, #tpu.memory_space<vmem>>, %arg13: memref<8x128xf32, #tpu.memory_space<vmem>>) attributes {dimension_semantics = [#tpu.dimension_semantics<parallel>, #tpu.dimension_semantics<arbitrary>], iteration_bounds = array<i64: 2, 2>, scalar_prefetch = 2 : i64, scratch_operands = 1 : i64, tpu.core_type = #tpu.core_type<tc>, window_params = [{transform_indices = @transform_0, window_bounds = array<i64: 16, 9>}, {transform_indices = @transform_1, window_bounds = array<i64: 16, 1>}, {pipeline_mode = #tpu.pipeline_mode<synchronous>, transform_indices = @transform_2, window_bounds = array<i64: 9, 128>}, {pipeline_mode = #tpu.pipeline_mode<synchronous>, transform_indices = @transform_3, window_bounds = array<i64: 1, 128>}, {pipeline_mode = #tpu.pipeline_mode<synchronous>, transform_indices = @transform_4, window_bounds = array<i64: 128, 128>}, {transform_indices = @transform_5, window_bounds = array<i64: 8, 8>}, {pipeline_mode = #tpu.pipeline_mode<synchronous>, transform_indices = @transform_6, window_bounds = array<i64: 8, 128>}, {pipeline_mode = #tpu.pipeline_mode<synchronous>, transform_indices = @transform_7, window_bounds = array<i64: 1, 128>}, {transform_indices = @transform_8, window_bounds = array<i64: 8, 128>}]} {
    %c0_i32 = arith.constant 0 : i32
    %0 = arith.cmpi eq, %arg1, %c0_i32 : i32
    %1 = arith.extui %0 : i1 to i32
    %c0_i32_0 = arith.constant 0 : i32
    %2 = arith.cmpi ne, %1, %c0_i32_0 : i32
    scf.if %2 {
      %cst = arith.constant 0xFF800000 : f32
      %11 = vector.broadcast %cst : f32 to vector<8x128xf32>
      %c0 = arith.constant 0 : index
      %c0_3 = arith.constant 0 : index
      %12 = vector.load %arg13[%c0, %c0_3] : memref<8x128xf32, #tpu.memory_space<vmem>>, vector<8x128xf32>
      tpu.vector_store %arg13[%c0, %c0_3], %11 {strides = array<i32>} : memref<8x128xf32, #tpu.memory_space<vmem>>, vector<8x128xf32>,
    } else {
    }
    %3 = arith.index_cast %arg0 : i32 to index
    %4 = memref.load %arg3[%3] : memref<2xi32, #tpu.memory_space<smem>>
    %5 = arith.cmpi slt, %arg1, %4 : i32
    %6 = arith.extui %5 : i1 to i32
    %c0_i32_1 = arith.constant 0 : i32
    %7 = arith.cmpi ne, %6, %c0_i32_1 : i32
    scf.if %7 {
      %c0 = arith.constant 0 : index
      %c0_3 = arith.constant 0 : index
      %11 = vector.load %arg4[%c0, %c0_3] : memref<16x9xf32, #tpu.memory_space<vmem>>, vector<16x9xf32>
      %c0_4 = arith.constant 0 : index
      %c0_5 = arith.constant 0 : index
      %12 = vector.load %arg6[%c0_4, %c0_5] : memref<9x128xf32, #tpu.memory_space<vmem>>, vector<9x128xf32>
      %cst = arith.constant dense<0.000000e+00> : vector<16x128xf32>
      %13 = tpu.matmul %11, %12, %cst {dimension_numbers = #tpu.dot_dimension_numbers<[1], [0], [0], [1], [0, 0, 1, 1], [], []>, precision = #tpu.contract_precision<fp32>} : vector<16x9xf32>, vector<9x128xf32>, vector<16x128xf32> -> vector<16x128xf32>
      %c0_6 = arith.constant 0 : index
      %c0_7 = arith.constant 0 : index
      %14 = vector.load %arg7[%c0_6, %c0_7] : memref<1x128xf32, #tpu.memory_space<vmem>>, vector<1x128xf32>
      %15 = vector.broadcast %14 : vector<1x128xf32> to vector<16x128xf32>
      %16 = arith.addf %13, %15 : vector<16x128xf32>
      %c0_8 = arith.constant 0 : index
      %c0_9 = arith.constant 0 : index
      %17 = vector.load %arg8[%c0_8, %c0_9] : memref<128x128xf32, #tpu.memory_space<vmem>>, vector<128x128xf32>
      %cst_10 = arith.constant dense<0.000000e+00> : vector<16x128xf32>
      %18 = tpu.matmul %16, %17, %cst_10 {dimension_numbers = #tpu.dot_dimension_numbers<[1], [0], [0], [1], [0, 0, 1, 1], [], []>, precision = #tpu.contract_precision<fp32>} : vector<16x128xf32>, vector<128x128xf32>, vector<16x128xf32> -> vector<16x128xf32>
      %cst_11 = arith.constant 0.000000e+00 : f32
      %19 = vector.broadcast %cst_11 : f32 to vector<16x128xf32>
      %20 = arith.cmpf ogt, %18, %19 : vector<16x128xf32>
      %cst_12 = arith.constant 2.000000e-01 : f32
      %21 = vector.broadcast %cst_12 : f32 to vector<16x128xf32>
      %22 = arith.mulf %21, %18 : vector<16x128xf32>
      %23 = arith.select %20, %18, %22 : vector<16x128xi1>, vector<16x128xf32>
      %24 = arith.mulf %16, %23 : vector<16x128xf32>
      %c0_13 = arith.constant 0 : index
      %c0_14 = arith.constant 0 : index
      %25 = vector.load %arg5[%c0_13, %c0_14] : memref<16x1xi32, #tpu.memory_space<vmem>>, vector<16x1xi32>
      %c8_i32 = arith.constant 8 : i32
      %26 = arith.muli %arg0, %c8_i32 : i32
      %27 = vector.broadcast %26 : i32 to vector<16x1xi32>
      %28 = arith.subi %25, %27 : vector<16x1xi32>
      %c0_i32_15 = arith.constant 0 : i32
      %29 = vector.broadcast %c0_i32_15 : i32 to vector<16x1xi32>
      %30 = arith.cmpi eq, %28, %29 : vector<16x1xi32>
      %cst_16 = arith.constant 0xFF800000 : f32
      %31 = vector.shape_cast %30 : vector<16x1xi1> to vector<16x1xi1>
      %32 = vector.broadcast %31 : vector<16x1xi1> to vector<16x128xi1>
      %33 = vector.broadcast %cst_16 : f32 to vector<16x128xf32>
      %34 = arith.select %32, %24, %33 : vector<16x128xi1>, vector<16x128xf32>
      %cst_17 = arith.constant dense<0xFF800000> : vector<128xf32>
      %35 = vector.multi_reduction <maximumf>, %34, %cst_17 [0] : vector<16x128xf32> to vector<128xf32>
      %36 = vector.shape_cast %35 : vector<128xf32> to vector<1x128xf32>
      %c1_i32_18 = arith.constant 1 : i32
      %37 = vector.broadcast %c1_i32_18 : i32 to vector<16x1xi32>
      %38 = arith.cmpi eq, %28, %37 : vector<16x1xi32>
      %cst_19 = arith.constant 0xFF800000 : f32
      %39 = vector.shape_cast %38 : vector<16x1xi1> to vector<16x1xi1>
      %40 = vector.broadcast %39 : vector<16x1xi1> to vector<16x128xi1>
      %41 = vector.broadcast %cst_19 : f32 to vector<16x128xf32>
      %42 = arith.select %40, %24, %41 : vector<16x128xi1>, vector<16x128xf32>
      %cst_20 = arith.constant dense<0xFF800000> : vector<128xf32>
      %43 = vector.multi_reduction <maximumf>, %42, %cst_20 [0] : vector<16x128xf32> to vector<128xf32>
      %44 = vector.shape_cast %43 : vector<128xf32> to vector<1x128xf32>
      %c2_i32 = arith.constant 2 : i32
      %45 = vector.broadcast %c2_i32 : i32 to vector<16x1xi32>
      %46 = arith.cmpi eq, %28, %45 : vector<16x1xi32>
      %cst_21 = arith.constant 0xFF800000 : f32
      %47 = vector.shape_cast %46 : vector<16x1xi1> to vector<16x1xi1>
      %48 = vector.broadcast %47 : vector<16x1xi1> to vector<16x128xi1>
      %49 = vector.broadcast %cst_21 : f32 to vector<16x128xf32>
      %50 = arith.select %48, %24, %49 : vector<16x128xi1>, vector<16x128xf32>
      %cst_22 = arith.constant dense<0xFF800000> : vector<128xf32>
      %51 = vector.multi_reduction <maximumf>, %50, %cst_22 [0] : vector<16x128xf32> to vector<128xf32>
      %52 = vector.shape_cast %51 : vector<128xf32> to vector<1x128xf32>
      %c3_i32 = arith.constant 3 : i32
      %53 = vector.broadcast %c3_i32 : i32 to vector<16x1xi32>
      %54 = arith.cmpi eq, %28, %53 : vector<16x1xi32>
      %cst_23 = arith.constant 0xFF800000 : f32
      %55 = vector.shape_cast %54 : vector<16x1xi1> to vector<16x1xi1>
      %56 = vector.broadcast %55 : vector<16x1xi1> to vector<16x128xi1>
      %57 = vector.broadcast %cst_23 : f32 to vector<16x128xf32>
      %58 = arith.select %56, %24, %57 : vector<16x128xi1>, vector<16x128xf32>
      %cst_24 = arith.constant dense<0xFF800000> : vector<128xf32>
      %59 = vector.multi_reduction <maximumf>, %58, %cst_24 [0] : vector<16x128xf32> to vector<128xf32>
      %60 = vector.shape_cast %59 : vector<128xf32> to vector<1x128xf32>
      %c4_i32 = arith.constant 4 : i32
      %61 = vector.broadcast %c4_i32 : i32 to vector<16x1xi32>
      %62 = arith.cmpi eq, %28, %61 : vector<16x1xi32>
      %cst_25 = arith.constant 0xFF800000 : f32
      %63 = vector.shape_cast %62 : vector<16x1xi1> to vector<16x1xi1>
      %64 = vector.broadcast %63 : vector<16x1xi1> to vector<16x128xi1>
      %65 = vector.broadcast %cst_25 : f32 to vector<16x128xf32>
      %66 = arith.select %64, %24, %65 : vector<16x128xi1>, vector<16x128xf32>
      %cst_26 = arith.constant dense<0xFF800000> : vector<128xf32>
      %67 = vector.multi_reduction <maximumf>, %66, %cst_26 [0] : vector<16x128xf32> to vector<128xf32>
      %68 = vector.shape_cast %67 : vector<128xf32> to vector<1x128xf32>
      %c5_i32 = arith.constant 5 : i32
      %69 = vector.broadcast %c5_i32 : i32 to vector<16x1xi32>
      %70 = arith.cmpi eq, %28, %69 : vector<16x1xi32>
      %cst_27 = arith.constant 0xFF800000 : f32
      %71 = vector.shape_cast %70 : vector<16x1xi1> to vector<16x1xi1>
      %72 = vector.broadcast %71 : vector<16x1xi1> to vector<16x128xi1>
      %73 = vector.broadcast %cst_27 : f32 to vector<16x128xf32>
      %74 = arith.select %72, %24, %73 : vector<16x128xi1>, vector<16x128xf32>
      %cst_28 = arith.constant dense<0xFF800000> : vector<128xf32>
      %75 = vector.multi_reduction <maximumf>, %74, %cst_28 [0] : vector<16x128xf32> to vector<128xf32>
      %76 = vector.shape_cast %75 : vector<128xf32> to vector<1x128xf32>
      %c6_i32 = arith.constant 6 : i32
      %77 = vector.broadcast %c6_i32 : i32 to vector<16x1xi32>
      %78 = arith.cmpi eq, %28, %77 : vector<16x1xi32>
      %cst_29 = arith.constant 0xFF800000 : f32
      %79 = vector.shape_cast %78 : vector<16x1xi1> to vector<16x1xi1>
      %80 = vector.broadcast %79 : vector<16x1xi1> to vector<16x128xi1>
      %81 = vector.broadcast %cst_29 : f32 to vector<16x128xf32>
      %82 = arith.select %80, %24, %81 : vector<16x128xi1>, vector<16x128xf32>
      %cst_30 = arith.constant dense<0xFF800000> : vector<128xf32>
      %83 = vector.multi_reduction <maximumf>, %82, %cst_30 [0] : vector<16x128xf32> to vector<128xf32>
      %84 = vector.shape_cast %83 : vector<128xf32> to vector<1x128xf32>
      %c7_i32 = arith.constant 7 : i32
      %85 = vector.broadcast %c7_i32 : i32 to vector<16x1xi32>
      %86 = arith.cmpi eq, %28, %85 : vector<16x1xi32>
      %cst_31 = arith.constant 0xFF800000 : f32
      %87 = vector.shape_cast %86 : vector<16x1xi1> to vector<16x1xi1>
      %88 = vector.broadcast %87 : vector<16x1xi1> to vector<16x128xi1>
      %89 = vector.broadcast %cst_31 : f32 to vector<16x128xf32>
      %90 = arith.select %88, %24, %89 : vector<16x128xi1>, vector<16x128xf32>
      %cst_32 = arith.constant dense<0xFF800000> : vector<128xf32>
      %91 = vector.multi_reduction <maximumf>, %90, %cst_32 [0] : vector<16x128xf32> to vector<128xf32>
      %92 = vector.shape_cast %91 : vector<128xf32> to vector<1x128xf32>
      %c0_33 = arith.constant 0 : index
      %c0_34 = arith.constant 0 : index
      %93 = vector.load %arg13[%c0_33, %c0_34] : memref<8x128xf32, #tpu.memory_space<vmem>>, vector<8x128xf32>
      %94 = tpu.concatenate %36, %44, %52, %60, %68, %76, %84, %92 in 0 : vector<1x128xf32>, vector<1x128xf32>, vector<1x128xf32>, vector<1x128xf32>, vector<1x128xf32>, vector<1x128xf32>, vector<1x128xf32>, vector<1x128xf32> -> vector<8x128xf32>
      %95 = arith.maximumf %93, %94 : vector<8x128xf32>
      %c0_35 = arith.constant 0 : index
      %c0_36 = arith.constant 0 : index
      %96 = vector.load %arg13[%c0_35, %c0_36] : memref<8x128xf32, #tpu.memory_space<vmem>>, vector<8x128xf32>
      tpu.vector_store %arg13[%c0_35, %c0_36], %95 {strides = array<i32>} : memref<8x128xf32, #tpu.memory_space<vmem>>, vector<8x128xf32>,
    } else {
    }
    %c1_i32 = arith.constant 1 : i32
    %8 = arith.cmpi eq, %arg1, %c1_i32 : i32
    %9 = arith.extui %8 : i1 to i32
    %c0_i32_2 = arith.constant 0 : i32
    %10 = arith.cmpi ne, %9, %c0_i32_2 : i32
    scf.if %10 {
      %c0 = arith.constant 0 : index
      %c0_3 = arith.constant 0 : index
      %11 = vector.load %arg13[%c0, %c0_3] : memref<8x128xf32, #tpu.memory_space<vmem>>, vector<8x128xf32>
      %cst = arith.constant 0xFF800000 : f32
      %12 = vector.broadcast %cst : f32 to vector<8x128xf32>
      %13 = arith.cmpf oeq, %11, %12 : vector<8x128xf32>
      %cst_4 = arith.constant 0.000000e+00 : f32
      %14 = vector.broadcast %cst_4 : f32 to vector<8x128xf32>
      %15 = arith.select %13, %14, %11 : vector<8x128xi1>, vector<8x128xf32>
      %c0_5 = arith.constant 0 : index
      %c0_6 = arith.constant 0 : index
      %16 = vector.load %arg9[%c0_5, %c0_6] : memref<8x8xf32, #tpu.memory_space<vmem>>, vector<8x8xf32>
      %c0_7 = arith.constant 0 : index
      %c0_8 = arith.constant 0 : index
      %17 = vector.load %arg10[%c0_7, %c0_8] : memref<8x128xf32, #tpu.memory_space<vmem>>, vector<8x128xf32>
      %cst_9 = arith.constant dense<0.000000e+00> : vector<8x128xf32>
      %18 = tpu.matmul %16, %17, %cst_9 {dimension_numbers = #tpu.dot_dimension_numbers<[1], [0], [0], [1], [0, 0, 1, 1], [], []>, precision = #tpu.contract_precision<fp32>} : vector<8x8xf32>, vector<8x128xf32>, vector<8x128xf32> -> vector<8x128xf32>
      %19 = arith.addf %15, %18 : vector<8x128xf32>
      %c0_10 = arith.constant 0 : index
      %c0_11 = arith.constant 0 : index
      %20 = vector.load %arg11[%c0_10, %c0_11] : memref<1x128xf32, #tpu.memory_space<vmem>>, vector<1x128xf32>
      %21 = vector.broadcast %20 : vector<1x128xf32> to vector<8x128xf32>
      %22 = arith.addf %19, %21 : vector<8x128xf32>
      %c0_12 = arith.constant 0 : index
      %c0_13 = arith.constant 0 : index
      %23 = vector.load %arg12[%c0_12, %c0_13] : memref<8x128xf32, #tpu.memory_space<vmem>>, vector<8x128xf32>
      tpu.vector_store %arg12[%c0_12, %c0_13], %22 {strides = array<i32>} : memref<8x128xf32, #tpu.memory_space<vmem>>, vector<8x128xf32>,
    } else {
    }
    return
  }
  func.func @transform_0(%arg0: i32, %arg1: i32, %arg2: memref<2xi32, #tpu.memory_space<smem>>, %arg3: memref<2xi32, #tpu.memory_space<smem>>) -> (i32, i32) {
    %0 = arith.index_cast %arg0 : i32 to index
    %1 = memref.load %arg2[%0] : memref<2xi32, #tpu.memory_space<smem>>
    %2 = arith.addi %1, %arg1 : i32
    %c2_i32 = arith.constant 2 : i32
    %3 = arith.minsi %2, %c2_i32 : i32
    %c0_i32 = arith.constant 0 : i32
    %c0_i32_0 = arith.constant 0 : i32
    return %3, %c0_i32 : i32, i32
  }
  func.func @transform_1(%arg0: i32, %arg1: i32, %arg2: memref<2xi32, #tpu.memory_space<smem>>, %arg3: memref<2xi32, #tpu.memory_space<smem>>) -> (i32, i32) {
    %0 = arith.index_cast %arg0 : i32 to index
    %1 = memref.load %arg2[%0] : memref<2xi32, #tpu.memory_space<smem>>
    %2 = arith.addi %1, %arg1 : i32
    %c2_i32 = arith.constant 2 : i32
    %3 = arith.minsi %2, %c2_i32 : i32
    %c0_i32 = arith.constant 0 : i32
    %c0_i32_0 = arith.constant 0 : i32
    return %3, %c0_i32 : i32, i32
  }
  func.func @transform_2(%arg0: i32, %arg1: i32, %arg2: memref<2xi32, #tpu.memory_space<smem>>, %arg3: memref<2xi32, #tpu.memory_space<smem>>) -> (i32, i32) {
    %c0_i32 = arith.constant 0 : i32
    %c0_i32_0 = arith.constant 0 : i32
    %c0_i32_1 = arith.constant 0 : i32
    return %c0_i32, %c0_i32_0 : i32, i32
  }
  func.func @transform_3(%arg0: i32, %arg1: i32, %arg2: memref<2xi32, #tpu.memory_space<smem>>, %arg3: memref<2xi32, #tpu.memory_space<smem>>) -> (i32, i32) {
    %c0_i32 = arith.constant 0 : i32
    %c0_i32_0 = arith.constant 0 : i32
    %c0_i32_1 = arith.constant 0 : i32
    return %c0_i32, %c0_i32_0 : i32, i32
  }
  func.func @transform_4(%arg0: i32, %arg1: i32, %arg2: memref<2xi32, #tpu.memory_space<smem>>, %arg3: memref<2xi32, #tpu.memory_space<smem>>) -> (i32, i32) {
    %c0_i32 = arith.constant 0 : i32
    %c0_i32_0 = arith.constant 0 : i32
    %c0_i32_1 = arith.constant 0 : i32
    return %c0_i32, %c0_i32_0 : i32, i32
  }
  func.func @transform_5(%arg0: i32, %arg1: i32, %arg2: memref<2xi32, #tpu.memory_space<smem>>, %arg3: memref<2xi32, #tpu.memory_space<smem>>) -> (i32, i32) {
    %c0_i32 = arith.constant 0 : i32
    %c0_i32_0 = arith.constant 0 : i32
    return %arg0, %c0_i32 : i32, i32
  }
  func.func @transform_6(%arg0: i32, %arg1: i32, %arg2: memref<2xi32, #tpu.memory_space<smem>>, %arg3: memref<2xi32, #tpu.memory_space<smem>>) -> (i32, i32) {
    %c0_i32 = arith.constant 0 : i32
    %c0_i32_0 = arith.constant 0 : i32
    %c0_i32_1 = arith.constant 0 : i32
    return %c0_i32, %c0_i32_0 : i32, i32
  }
  func.func @transform_7(%arg0: i32, %arg1: i32, %arg2: memref<2xi32, #tpu.memory_space<smem>>, %arg3: memref<2xi32, #tpu.memory_space<smem>>) -> (i32, i32) {
    %c0_i32 = arith.constant 0 : i32
    %c0_i32_0 = arith.constant 0 : i32
    %c0_i32_1 = arith.constant 0 : i32
    return %c0_i32, %c0_i32_0 : i32, i32
  }
  func.func @transform_8(%arg0: i32, %arg1: i32, %arg2: memref<2xi32, #tpu.memory_space<smem>>, %arg3: memref<2xi32, #tpu.memory_space<smem>>) -> (i32, i32) {
    %c0_i32 = arith.constant 0 : i32
    %c0_i32_0 = arith.constant 0 : i32
    return %arg0, %c0_i32 : i32, i32
  }
}

</mosaic_0001>

<llo_original>
// kernel: tpu_custom_call.1
$region0: #{tpu_custom_call.1}
  #allocation0 [shape = 'u32[]', space=smem, size = 0x4, offset = 0x4, fixed_abs, tag = 'smem constant byte address 0x4 - core index']
  #allocation1 [shape = 'u32[72,128]{1,0:T(1,128)}', space=vmem, size = 0x9000, scoped, tag = 'internal scratch']
  #allocation2 [shape = 'f32[8,128]{1,0:T(8,128)}', space=vmem, size = 0x1000, scoped, tag = 'scratch operand']
  #allocation3 [shape = 's32[1]{0}', space=sflag, size = 0x4, scoped, tag = 'scoped memory for tpu_custom_call.1']
  #allocation4 [shape = 'u8[512]{0}', space=smem, size = 0x200, scoped, tag = 'prefetched SMEM operand 0']
  #allocation5 [shape = 'u8[512]{0}', space=smem, size = 0x200, scoped, tag = 'prefetched SMEM operand 1']
  %s0 = inlined_call_operand.vmem [shape: s32[2], index: 0, kind: input, shape index: {}]
  %s1 = inlined_call_operand.vmem [shape: s32[2], index: 1, kind: input, shape index: {}]
  %s2 = inlined_call_operand.vmem [shape: f32[48,9], index: 2, kind: input, shape index: {}]
  %s3 = inlined_call_operand.vmem [shape: s32[48,1], index: 3, kind: input, shape index: {}]
  %s4 = inlined_call_operand.vmem [shape: f32[9,128], index: 4, kind: input, shape index: {}]
  %s5 = inlined_call_operand.vmem [shape: f32[1,128], index: 5, kind: input, shape index: {}]
  %s6 = inlined_call_operand.hbm [shape: f32[128,128], index: 6, kind: input, shape index: {}]
  %s7 = inlined_call_operand.vmem [shape: f32[16,8], index: 7, kind: input, shape index: {}]
  %s8 = inlined_call_operand.vmem [shape: f32[8,128], index: 8, kind: input, shape index: {}]
  %s9 = inlined_call_operand.vmem [shape: f32[1,128], index: 9, kind: input, shape index: {}]
  %s10 = inlined_call_operand.hbm [shape: f32[16,128], index: 10, kind: output, shape index: {}]
  %s11 = sld [smem:[#allocation0]]
  $region81: #{tpu_custom_call.1} parent=0
    _
  %s13 = ssub.s32 1, %s11
  %s14 = scalar_select 0, %s13, %s11
  %s16 = sshll.u32 %s0, 4
  %s17 = int_to_ptr.vmem [resolvable:$true] %s16
  %19 = dma.vmem_to_smem %s17, 16, [#allocation4], [#allocation3]
  %s21 = sshll.u32 %s1, 4
  %s22 = int_to_ptr.vmem [resolvable:$true] %s21
  %24 = dma.vmem_to_smem %s22, 16, [#allocation5], [#allocation3]
  %26 = dma.done [#allocation3], 32
  %27 = sfence
  $region1: #{tpu_custom_call.1} parent=0
    #allocation6 [shape = 'u8[65536]{0}', space=vmem, size = 0x10000, scoped, tag = 'input window, operand 6, single buffered']
    #allocation7 [shape = 's32[2]{0}', space=sflag, size = 0x8, scoped, tag = 'scoped memory for tpu_custom_call.1']
    #allocation8 [shape = 's32[2]{0}', space=sflag, size = 0x8, scoped, tag = 'scoped memory for tpu_custom_call.1']
    #allocation9 [shape = 'u8[8192]{0}', space=vmem, size = 0x2000, scoped, tag = 'output window, operand 0']
    %28 = vsyncpa [#allocation7], 0
    %29 = vsyncpa [#allocation8], 0
    %s30 = scalar_lea.sflag [#allocation8], 1
    %31 = vsyncpa %s30, 0
    loop: start=0, step=1, limit=6
    $region2: #{tpu_custom_call.1} parent=1 // loop_pre_header
      _
    $region3: #{tpu_custom_call.1} parent=1 // loop_header
      %s33 = sphi 0, %s37
      %p34 = scmp.ge.s32.totalorder %s33, 6
      %s40 = sphi 0, %s52
      %s41 = sphi 0, %s48
      %s42 = sphi 0, %s40
      %s43 = sphi 0, %s41
      %s44 = sphi 0, %s42
      %s45 = sphi 0, %s43
      %s63 = sphi 0, %s65
      %s66 = sphi 0, %s63
      %s67 = sphi 0, %s66
      %s83 = sphi 0, %s67
      %s97 = sphi 0, %s99
      %s100 = sphi 0, %s97
      %s101 = sphi 0, %s100
      %s117 = sphi 0, %s101
      %s121 = sphi 0, %s121
      %s123 = sphi 0, %s121
      %s124 = sphi 0, %s123
      %s138 = sphi 0, %s124
      %s142 = sphi 0, %s142
      %s144 = sphi 0, %s142
      %s145 = sphi 0, %s144
      %s159 = sphi 0, %s145
      %s163 = sphi 0, %s163
      %s165 = sphi 0, %s163
      %s166 = sphi 0, %s165
      %s180 = sphi 0, %s166
      %s186 = sphi 0, %s188
      %s189 = sphi 0, %s186
      %s190 = sphi 0, %s189
      %s206 = sphi 0, %s190
      %s210 = sphi 0, %s210
      %s212 = sphi 0, %s210
      %s213 = sphi 0, %s212
      %s227 = sphi 0, %s213
      %s231 = sphi 0, %s231
      %s233 = sphi 0, %s231
      %s234 = sphi 0, %s233
      %s248 = sphi 0, %s234
      %s254 = sphi 0, %s256
      %s257 = sphi 0, %s254
      %s258 = sphi 0, %s257
      %s274 = sphi 0, %s258
    $region4: #{tpu_custom_call.1} parent=1 // loop_header_branch
      %36 = sbr.rel (%p34) target = $region8
    $region5: #{tpu_custom_call.1} parent=1 // loop_body
      %s38 = ssub.s32 %s33, 1
      %s39 = ssub.s32 %s33, 2
      %s46 = sadd.s32 1, %s41
      %p47 = scmp.ge.s32.totalorder %s46, 2
      %s48 = scalar_select %p47, 0, %s46
      %s49 = sadd.s32 1, %s40
      %s50 = scalar_select %p47, %s49, %s40
      %p51 = scmp.ge.s32.totalorder %s50, 2
      %s52 = scalar_select %p51, 0, %s50
      %s53 = sld [smem:[#allocation4 + %s40]]
      %s54 = sadd.s32 %s53, %s41
      %p55 = scmp.lt.s32.totalorder %s54, 2
      %s56 = scalar_select %p55, %s54, 2
      %s57 = sld [smem:[#allocation4 + %s52]]
      %s58 = sadd.s32 %s57, %s48
      %p59 = scmp.lt.s32.totalorder %s58, 2
      %s60 = scalar_select %p59, %s58, 2
      %s61 = ssub.s32 %s56, %s60
      %p62 = scmp.eq.s32.totalorder %s61, 0
      %s64 = sadd.s32 %s63, 1
      %s65 = scalar_select %p62, %s63, %s64
      %p68 = pneg %p62
      %p69 = scmp.eq.s32.totalorder %s33, 3
      %p70 = por %p68, %p69
      %p71 = scmp.ne.s32.totalorder %s63, %s66
      %p72 = scmp.eq.s32.totalorder %s33, 0
      %p73 = por %p71, %p72
      %p74 = scmp.ne.s32.totalorder %s63, %s66
      %p75 = scmp.eq.s32.totalorder %s38, 3
      %p76 = por %p74, %p75
      %p77 = scmp.ne.s32.totalorder %s66, %s67
      %p78 = scmp.eq.s32.totalorder %s38, 0
      %p79 = por %p77, %p78
      %p80 = scmp.ne.s32.totalorder %s66, %s67
      %p81 = scmp.eq.s32.totalorder %s39, 3
      %p82 = por %p80, %p81
      %p84 = scmp.ne.s32.totalorder %s67, %s83
      %p85 = scmp.eq.s32.totalorder %s39, 0
      %p86 = por %p84, %p85
      %s87 = sld [smem:[#allocation4 + %s40]]
      %s88 = sadd.s32 %s87, %s41
      %p89 = scmp.lt.s32.totalorder %s88, 2
      %s90 = scalar_select %p89, %s88, 2
      %s91 = sld [smem:[#allocation4 + %s52]]
      %s92 = sadd.s32 %s91, %s48
      %p93 = scmp.lt.s32.totalorder %s92, 2
      %s94 = scalar_select %p93, %s92, 2
      %s95 = ssub.s32 %s90, %s94
      %p96 = scmp.eq.s32.totalorder %s95, 0
      %s98 = sadd.s32 %s97, 1
      %s99 = scalar_select %p96, %s97, %s98
      %p102 = pneg %p96
      %p103 = scmp.eq.s32.totalorder %s33, 3
      %p104 = por %p102, %p103
      %p105 = scmp.ne.s32.totalorder %s97, %s100
      %p106 = scmp.eq.s32.totalorder %s33, 0
      %p107 = por %p105, %p106
      %p108 = scmp.ne.s32.totalorder %s97, %s100
      %p109 = scmp.eq.s32.totalorder %s38, 3
      %p110 = por %p108, %p109
      %p111 = scmp.ne.s32.totalorder %s100, %s101
      %p112 = scmp.eq.s32.totalorder %s38, 0
      %p113 = por %p111, %p112
      %p114 = scmp.ne.s32.totalorder %s100, %s101
      %p115 = scmp.eq.s32.totalorder %s39, 3
      %p116 = por %p114, %p115
      %p118 = scmp.ne.s32.totalorder %s101, %s117
      %p119 = scmp.eq.s32.totalorder %s39, 0
      %p120 = por %p118, %p119
      %s122 = sadd.s32 %s121, 1
      %p125 = scmp.eq.s32.totalorder %s33, 3
      %p126 = scmp.ne.s32.totalorder %s121, %s123
      %p127 = scmp.eq.s32.totalorder %s33, 0
      %p128 = por %p126, %p127
      %p129 = scmp.ne.s32.totalorder %s121, %s123
      %p130 = scmp.eq.s32.totalorder %s38, 3
      %p131 = por %p129, %p130
      %p132 = scmp.ne.s32.totalorder %s123, %s124
      %p133 = scmp.eq.s32.totalorder %s38, 0
      %p134 = por %p132, %p133
      %p135 = scmp.ne.s32.totalorder %s123, %s124
      %p136 = scmp.eq.s32.totalorder %s39, 3
      %p137 = por %p135, %p136
      %p139 = scmp.ne.s32.totalorder %s124, %s138
      %p140 = scmp.eq.s32.totalorder %s39, 0
      %p141 = por %p139, %p140
      %s143 = sadd.s32 %s142, 1
      %p146 = scmp.eq.s32.totalorder %s33, 3
      %p147 = scmp.ne.s32.totalorder %s142, %s144
      %p148 = scmp.eq.s32.totalorder %s33, 0
      %p149 = por %p147, %p148
      %p150 = scmp.ne.s32.totalorder %s142, %s144
      %p151 = scmp.eq.s32.totalorder %s38, 3
      %p152 = por %p150, %p151
      %p153 = scmp.ne.s32.totalorder %s144, %s145
      %p154 = scmp.eq.s32.totalorder %s38, 0
      %p155 = por %p153, %p154
      %p156 = scmp.ne.s32.totalorder %s144, %s145
      %p157 = scmp.eq.s32.totalorder %s39, 3
      %p158 = por %p156, %p157
      %p160 = scmp.ne.s32.totalorder %s145, %s159
      %p161 = scmp.eq.s32.totalorder %s39, 0
      %p162 = por %p160, %p161
      %s164 = sadd.s32 %s163, 1
      %p167 = scmp.eq.s32.totalorder %s33, 3
      %p168 = scmp.ne.s32.totalorder %s163, %s165
      %p169 = scmp.eq.s32.totalorder %s33, 0
      %p170 = por %p168, %p169
      %p171 = scmp.ne.s32.totalorder %s163, %s165
      %p172 = scmp.eq.s32.totalorder %s38, 3
      %p173 = por %p171, %p172
      %p174 = scmp.ne.s32.totalorder %s165, %s166
      %p175 = scmp.eq.s32.totalorder %s38, 0
      %p176 = por %p174, %p175
      %p177 = scmp.ne.s32.totalorder %s165, %s166
      %p178 = scmp.eq.s32.totalorder %s39, 3
      %p179 = por %p177, %p178
      %p181 = scmp.ne.s32.totalorder %s166, %s180
      %p182 = scmp.eq.s32.totalorder %s39, 0
      %p183 = por %p181, %p182
      %s184 = ssub.s32 %s40, %s52
      %p185 = scmp.eq.s32.totalorder %s184, 0
      %s187 = sadd.s32 %s186, 1
      %s188 = scalar_select %p185, %s186, %s187
      %p191 = pneg %p185
      %p192 = scmp.eq.s32.totalorder %s33, 3
      %p193 = por %p191, %p192
      %p194 = scmp.ne.s32.totalorder %s186, %s189
      %p195 = scmp.eq.s32.totalorder %s33, 0
      %p196 = por %p194, %p195
      %p197 = scmp.ne.s32.totalorder %s186, %s189
      %p198 = scmp.eq.s32.totalorder %s38, 3
      %p199 = por %p197, %p198
      %p200 = scmp.ne.s32.totalorder %s189, %s190
      %p201 = scmp.eq.s32.totalorder %s38, 0
      %p202 = por %p200, %p201
      %p203 = scmp.ne.s32.totalorder %s189, %s190
      %p204 = scmp.eq.s32.totalorder %s39, 3
      %p205 = por %p203, %p204
      %p207 = scmp.ne.s32.totalorder %s190, %s206
      %p208 = scmp.eq.s32.totalorder %s39, 0
      %p209 = por %p207, %p208
      %s211 = sadd.s32 %s210, 1
      %p214 = scmp.eq.s32.totalorder %s33, 3
      %p215 = scmp.ne.s32.totalorder %s210, %s212
      %p216 = scmp.eq.s32.totalorder %s33, 0
      %p217 = por %p215, %p216
      %p218 = scmp.ne.s32.totalorder %s210, %s212
      %p219 = scmp.eq.s32.totalorder %s38, 3
      %p220 = por %p218, %p219
      %p221 = scmp.ne.s32.totalorder %s212, %s213
      %p222 = scmp.eq.s32.totalorder %s38, 0
      %p223 = por %p221, %p222
      %p224 = scmp.ne.s32.totalorder %s212, %s213
      %p225 = scmp.eq.s32.totalorder %s39, 3
      %p226 = por %p224, %p225
      %p228 = scmp.ne.s32.totalorder %s213, %s227
      %p229 = scmp.eq.s32.totalorder %s39, 0
      %p230 = por %p228, %p229
      %s232 = sadd.s32 %s231, 1
      %p235 = scmp.eq.s32.totalorder %s33, 3
      %p236 = scmp.ne.s32.totalorder %s231, %s233
      %p237 = scmp.eq.s32.totalorder %s33, 0
      %p238 = por %p236, %p237
      %p239 = scmp.ne.s32.totalorder %s231, %s233
      %p240 = scmp.eq.s32.totalorder %s38, 3
      %p241 = por %p239, %p240
      %p242 = scmp.ne.s32.totalorder %s233, %s234
      %p243 = scmp.eq.s32.totalorder %s38, 0
      %p244 = por %p242, %p243
      %p245 = scmp.ne.s32.totalorder %s233, %s234
      %p246 = scmp.eq.s32.totalorder %s39, 3
      %p247 = por %p245, %p246
      %p249 = scmp.ne.s32.totalorder %s234, %s248
      %p250 = scmp.eq.s32.totalorder %s39, 0
      %p251 = por %p249, %p250
      %s252 = ssub.s32 %s40, %s52
      %p253 = scmp.eq.s32.totalorder %s252, 0
      %s255 = sadd.s32 %s254, 1
      %s256 = scalar_select %p253, %s254, %s255
      %p259 = pneg %p253
      %p260 = scmp.eq.s32.totalorder %s33, 3
      %p261 = por %p259, %p260
      %p262 = scmp.ne.s32.totalorder %s254, %s257
      %p263 = scmp.eq.s32.totalorder %s33, 0
      %p264 = por %p262, %p263
      %p265 = scmp.ne.s32.totalorder %s254, %s257
      %p266 = scmp.eq.s32.totalorder %s38, 3
      %p267 = por %p265, %p266
      %p268 = scmp.ne.s32.totalorder %s257, %s258
      %p269 = scmp.eq.s32.totalorder %s38, 0
      %p270 = por %p268, %p269
      %p271 = scmp.ne.s32.totalorder %s257, %s258
      %p272 = scmp.eq.s32.totalorder %s39, 3
      %p273 = por %p271, %p272
      %p275 = scmp.ne.s32.totalorder %s258, %s274
      %p276 = scmp.eq.s32.totalorder %s39, 0
      %p277 = por %p275, %p276
      %p278 = scmp.le.s32.totalorder 1, %s33
      %p279 = scmp.lt.s32.totalorder %s33, 5
      %p280 = pnand %p278, %p279
      %p281 = pneg %p280
      // Predicated region
      $region9: #{tpu_custom_call.1} parent=5 // pred_check
        _
      $region10: #{tpu_custom_call.1} parent=5 // pred_check_branch
        %283 = sbr.rel (%p280) target = $region12
      $region11: #{tpu_custom_call.1} parent=5 // pred_region
        %s284 = ssub.s32 %s33, 1
        // Predicated region
        $region13: #{tpu_custom_call.1} parent=11 // pred_check
          %p285 = pneg %p134
        $region14: #{tpu_custom_call.1} parent=11 // pred_check_branch
          %287 = sbr.rel (%p285) target = $region16
        $region15: #{tpu_custom_call.1} parent=11 // pred_region
          _
        $region16: #{tpu_custom_call.1} parent=11 // pred_fallthru
          _
        // Predicated region
        $region17: #{tpu_custom_call.1} parent=11 // pred_check
          %p288 = pneg %p155
        $region18: #{tpu_custom_call.1} parent=11 // pred_check_branch
          %290 = sbr.rel (%p288) target = $region20
        $region19: #{tpu_custom_call.1} parent=11 // pred_region
          _
        $region20: #{tpu_custom_call.1} parent=11 // pred_fallthru
          _
        // Predicated region
        $region21: #{tpu_custom_call.1} parent=11 // pred_check
          %p291 = pneg %p176
        $region22: #{tpu_custom_call.1} parent=11 // pred_check_branch
          %293 = sbr.rel (%p291) target = $region24
        $region23: #{tpu_custom_call.1} parent=11 // pred_region
          %295 = vsyncadd [#allocation7], 0
          %s296 = sshll.u32 %s6, 4
          %s297 = int_to_ptr.hbm [resolvable:$true] %s296
          %s298 = sshll.u32 [#allocation6], 4
          %s299 = int_to_ptr.vmem [resolvable:$true] %s298
          %304 = dma.hbm_to_vmem [thread:$0]  %s297, 2048, %s299, [#allocation7], 128, 128, 8
        $region24: #{tpu_custom_call.1} parent=11 // pred_fallthru
          _
        // Predicated region
        $region25: #{tpu_custom_call.1} parent=11 // pred_check
          %p305 = pneg %p223
        $region26: #{tpu_custom_call.1} parent=11 // pred_check_branch
          %307 = sbr.rel (%p305) target = $region28
        $region27: #{tpu_custom_call.1} parent=11 // pred_region
          _
        $region28: #{tpu_custom_call.1} parent=11 // pred_fallthru
          _
        // Predicated region
        $region29: #{tpu_custom_call.1} parent=11 // pred_check
          %p308 = pneg %p244
        $region30: #{tpu_custom_call.1} parent=11 // pred_check_branch
          %310 = sbr.rel (%p308) target = $region32
        $region31: #{tpu_custom_call.1} parent=11 // pred_region
          _
        $region32: #{tpu_custom_call.1} parent=11 // pred_fallthru
          _
      $region12: #{tpu_custom_call.1} parent=5 // pred_fallthru
        _
      %p311 = scmp.lt.s32.totalorder %s33, 4
      // Predicated region
      $region33: #{tpu_custom_call.1} parent=5 // pred_check
        %p312 = pneg %p311
      $region34: #{tpu_custom_call.1} parent=5 // pred_check_branch
        %314 = sbr.rel (%p312) target = $region36
      $region35: #{tpu_custom_call.1} parent=5 // pred_region
        // Predicated region
        $region37: #{tpu_custom_call.1} parent=35 // pred_check
          %p315 = pneg %p73
        $region38: #{tpu_custom_call.1} parent=35 // pred_check_branch
          %317 = sbr.rel (%p315) target = $region40
        $region39: #{tpu_custom_call.1} parent=35 // pred_region
          %s318 = sld [smem:[#allocation4 + %s40]]
          %s319 = sadd.s32 %s318, %s41
          %p320 = scmp.lt.s32.totalorder %s319, 2
          %s321 = scalar_select %p320, %s319, 2
          %s322 = smul.u32 2, %s321
          %p323 = scmp.lt.s32.totalorder %s322, 5
          %s324 = scalar_select %p323, %s322, 5
          %s325 = smul.addr %s324, 8
          %s326 = scalar_lea.vmem %s2, %s325
          %s327 = sld [smem:[#allocation4 + %s40]]
          %s328 = sadd.s32 %s327, %s41
          %p329 = scmp.lt.s32.totalorder %s328, 2
          %s330 = scalar_select %p329, %s328, 2
          %s331 = smul.u32 2, %s330
        $region40: #{tpu_custom_call.1} parent=35 // pred_fallthru
          _
        // Predicated region
        $region41: #{tpu_custom_call.1} parent=35 // pred_check
          %p332 = pneg %p107
        $region42: #{tpu_custom_call.1} parent=35 // pred_check_branch
          %334 = sbr.rel (%p332) target = $region44
        $region43: #{tpu_custom_call.1} parent=35 // pred_region
          %s335 = sld [smem:[#allocation4 + %s40]]
          %s336 = sadd.s32 %s335, %s41
          %p337 = scmp.lt.s32.totalorder %s336, 2
          %s338 = scalar_select %p337, %s336, 2
          %s339 = smul.u32 2, %s338
          %p340 = scmp.lt.s32.totalorder %s339, 5
          %s341 = scalar_select %p340, %s339, 5
          %s342 = smul.addr %s341, 8
          %s343 = scalar_lea.vmem %s3, %s342
          %s344 = sld [smem:[#allocation4 + %s40]]
          %s345 = sadd.s32 %s344, %s41
          %p346 = scmp.lt.s32.totalorder %s345, 2
          %s347 = scalar_select %p346, %s345, 2
          %s348 = smul.u32 2, %s347
        $region44: #{tpu_custom_call.1} parent=35 // pred_fallthru
          _
        // Predicated region
        $region45: #{tpu_custom_call.1} parent=35 // pred_check
          %p349 = pneg %p196
        $region46: #{tpu_custom_call.1} parent=35 // pred_check_branch
          %351 = sbr.rel (%p349) target = $region48
        $region47: #{tpu_custom_call.1} parent=35 // pred_region
          %p352 = scmp.lt.s32.totalorder %s40, 1
          %s353 = scalar_select %p352, %s40, 1
          %s354 = smul.addr %s353, 8
          %s355 = scalar_lea.vmem %s7, %s354
        $region48: #{tpu_custom_call.1} parent=35 // pred_fallthru
          _
      $region36: #{tpu_custom_call.1} parent=5 // pred_fallthru
        _
      %p356 = scmp.le.s32.totalorder 1, %s33
      %p357 = scmp.lt.s32.totalorder %s33, 5
      %p358 = pnand %p356, %p357
      %p359 = pneg %p358
      // Predicated region
      $region49: #{tpu_custom_call.1} parent=5 // pred_check
        _
      $region50: #{tpu_custom_call.1} parent=5 // pred_check_branch
        %361 = sbr.rel (%p358) target = $region52
      $region51: #{tpu_custom_call.1} parent=5 // pred_region
        %s362 = ssub.s32 %s33, 1
        // Predicated region
        $region53: #{tpu_custom_call.1} parent=51 // pred_check
          %p363 = pneg %p176
        $region54: #{tpu_custom_call.1} parent=51 // pred_check_branch
          %365 = sbr.rel (%p363) target = $region56
        $region55: #{tpu_custom_call.1} parent=51 // pred_region
          %367 = dma.done [#allocation7], 2048
        $region56: #{tpu_custom_call.1} parent=51 // pred_fallthru
          _
        %s368 = sld [smem:[#allocation4 + %s42]]
        %s369 = sadd.s32 %s368, %s43
        %p370 = scmp.lt.s32.totalorder %s369, 2
        %s371 = scalar_select %p370, %s369, 2
        %s372 = smul.u32 2, %s371
        %p373 = scmp.lt.s32.totalorder %s372, 5
        %s374 = scalar_select %p373, %s372, 5
        %s375 = smul.addr %s374, 8
        %s376 = scalar_lea.vmem %s2, %s375
        %p377 = pneg %p79
        %p378 = pneg %p76
        %s379 = sld [smem:[#allocation4 + %s42]]
        %s380 = sadd.s32 %s379, %s43
        %p381 = scmp.lt.s32.totalorder %s380, 2
        %s382 = scalar_select %p381, %s380, 2
        %s383 = smul.u32 2, %s382
        %p384 = scmp.lt.s32.totalorder %s383, 5
        %s385 = scalar_select %p384, %s383, 5
        %s386 = smul.addr %s385, 8
        %s387 = scalar_lea.vmem %s3, %s386
        %p388 = pneg %p113
        %p389 = pneg %p110
        %p390 = pneg %p134
        %p391 = pneg %p131
        %p392 = pneg %p155
        %p393 = pneg %p152
        %p394 = pneg %p176
        %p395 = pneg %p173
        %p396 = scmp.lt.s32.totalorder %s42, 1
        %s397 = scalar_select %p396, %s42, 1
        %s398 = smul.addr %s397, 8
        %s399 = scalar_lea.vmem %s7, %s398
        %p400 = pneg %p202
        %p401 = pneg %p199
        %p402 = pneg %p223
        %p403 = pneg %p220
        %p404 = pneg %p244
        %p405 = pneg %p241
        %p406 = pneg %p270
        %p407 = pneg %p267
        %s408 = sand.u32 %s257, 1
        %s409 = scalar_lea.sflag [#allocation8], %s408
        %s410 = sand.u32 %s257, 1
        %s411 = smul.addr %s410, 8
        %s412 = scalar_lea.vmem [#allocation9], %s411
        %s413 = sld [smem:[#allocation4 + %s42]]
        %s414 = sadd.s32 %s413, %s43
        %p415 = scmp.lt.s32.totalorder %s414, 2
        %s416 = scalar_select %p415, %s414, 2
        %s417 = smul.u32 2, %s416
        %p418 = scmp.lt.s32.totalorder %s417, 5
        %s419 = scalar_select %p418, %s417, 5
        %s420 = smul.addr %s419, 8
        %s421 = scalar_lea.vmem %s2, %s420
        %s422 = sld [smem:[#allocation4 + %s42]]
        %s423 = sadd.s32 %s422, %s43
        %p424 = scmp.lt.s32.totalorder %s423, 2
        %s425 = scalar_select %p424, %s423, 2
        %s426 = smul.u32 2, %s425
        %s427 = sld [smem:[#allocation4 + %s42]]
        %s428 = sadd.s32 %s427, %s43
        %p429 = scmp.lt.s32.totalorder %s428, 2
        %s430 = scalar_select %p429, %s428, 2
        %s431 = smul.u32 2, %s430
        %p432 = scmp.lt.s32.totalorder %s431, 5
        %s433 = scalar_select %p432, %s431, 5
        %s434 = smul.addr %s433, 8
        %s435 = scalar_lea.vmem %s3, %s434
        %s436 = sld [smem:[#allocation4 + %s42]]
        %s437 = sadd.s32 %s436, %s43
        %p438 = scmp.lt.s32.totalorder %s437, 2
        %s439 = scalar_select %p438, %s437, 2
        %s440 = smul.u32 2, %s439
        %p441 = scmp.lt.s32.totalorder %s42, 1
        %s442 = scalar_select %p441, %s42, 1
        %s443 = smul.addr %s442, 8
        %s444 = scalar_lea.vmem %s7, %s443
        %p445 = scmp.eq.s32.totalorder %s43, 0
        // Predicated region
        $region57: #{tpu_custom_call.1} parent=51 // pred_check
          %p446 = pneg %p445
        $region58: #{tpu_custom_call.1} parent=51 // pred_check_branch
          %448 = sbr.rel (%p446) target = $region60
        $region59: #{tpu_custom_call.1} parent=51 // pred_region
          %449 = vst [vmem:[#allocation2] sm:$0xff] -inf
        $region60: #{tpu_custom_call.1} parent=51 // pred_fallthru
          _
        %s450 = sld [smem:[#allocation5 + %s42]]
        %p451 = scmp.lt.s32.totalorder %s43, %s450
        // Predicated region
        $region61: #{tpu_custom_call.1} parent=51 // pred_check
          %p452 = pneg %p451
        $region62: #{tpu_custom_call.1} parent=51 // pred_check_branch
          %454 = sbr.rel (%p452) target = $region64
        $region63: #{tpu_custom_call.1} parent=51 // pred_region
          %v455 = vld [vmem:[%s421] sm:$0xff]
          %v456 = vld [vmem:[%s421 + $0x8] sm:$0xff]
          %v457 = vld [vmem:[%s4] sm:$0xff]
          %v458 = vld [vmem:[%s4 + $0x8] sm:$0x1]
          %v459 = vld [vmem:[%s5] sm:$0x1]
          %v461 = vperm.slane %v459, 0
          %vm463 = vcmask 72704
          %v465 = vsel %vm463, %v455, 0
          %v468 = vsel %vm463, %v456, 0
          %vm470 = vcmask 1040384
          %v472 = vsel %vm470, %v458, 0
          %474 = vmatpush.msra.mxu0 0.0
          %475 = vmatpush.msra.mxu0 0.0
          %476 = vmatpush.msra.mxu0 0.0
          %477 = vmatpush.msra.mxu0 0.0
          %478 = vmatpush.msra.mxu0 0.0
          %479 = vmatpush.msra.mxu0 0.0
          %480 = vmatpush.msra.mxu0 0.0
          %481 = vmatpush.msra.mxu0 0.0
          %482 = vmatpush.msra.mxu0 0.0
          %483 = vmatpush.msra.mxu0 0.0
          %484 = vmatpush.msra.mxu0 0.0
          %485 = vmatpush.msra.mxu0 0.0
          %486 = vmatpush.msra.mxu0 0.0
          %487 = vmatpush.msra.mxu0 0.0
          %v488 = vand.u32 %v472, 4294901760
          %489 = vmatpush.msra.mxu0 %v488
          %v490 = vand.u32 %v457, 4294901760
          %491 = vmatpush.msra.mxu0 %v490
          %v492 = vand.u32 %v465, 4294901760
          %v493 = vsub.f32 %v465, %v492
          %v494 = vand.u32 %v493, 4294901760
          %v495 = vsub.f32 %v493, %v494
          %v496 = vand.u32 %v495, 4294901760
          %497 = vmatmul.f32.gmra.mxu0 %v496
          %v498 = vpop.f32.mrf.mxu0
          %v499 = vadd.f32 %v461, %v498
          %v500 = vand.u32 %v468, 4294901760
          %v501 = vsub.f32 %v468, %v500
          %v502 = vand.u32 %v501, 4294901760
          %v503 = vsub.f32 %v501, %v502
          %v504 = vand.u32 %v503, 4294901760
          %505 = vmatmul.f32.gmra.mxu0 %v504
          %v506 = vpop.f32.mrf.mxu0
          %v507 = vadd.f32 %v461, %v506
          %508 = vdwg.mxu0
          %509 = vmatpush.msra.mxu0 0.0
          %510 = vmatpush.msra.mxu0 0.0
          %511 = vmatpush.msra.mxu0 0.0
          %512 = vmatpush.msra.mxu0 0.0
          %513 = vmatpush.msra.mxu0 0.0
          %514 = vmatpush.msra.mxu0 0.0
          %515 = vmatpush.msra.mxu0 0.0
          %516 = vmatpush.msra.mxu0 0.0
          %517 = vmatpush.msra.mxu0 0.0
          %518 = vmatpush.msra.mxu0 0.0
          %519 = vmatpush.msra.mxu0 0.0
          %520 = vmatpush.msra.mxu0 0.0
          %521 = vmatpush.msra.mxu0 0.0
          %522 = vmatpush.msra.mxu0 0.0
          %v523 = vand.u32 %v472, 4294901760
          %v524 = vsub.f32 %v472, %v523
          %v525 = vand.u32 %v524, 4294901760
          %v526 = vsub.f32 %v524, %v525
          %v527 = vand.u32 %v526, 4294901760
          %528 = vmatpush.msra.mxu0 %v527
          %v529 = vand.u32 %v457, 4294901760
          %v530 = vsub.f32 %v457, %v529
          %v531 = vand.u32 %v530, 4294901760
          %v532 = vsub.f32 %v530, %v531
          %v533 = vand.u32 %v532, 4294901760
          %534 = vmatpush.msra.mxu0 %v533
          %v535 = vand.u32 %v465, 4294901760
          %536 = vmatmul.f32.gmra.mxu0 %v535
          %v537 = vpop.f32.mrf.mxu0
          %v538 = vadd.f32 %v499, %v537
          %v539 = vand.u32 %v468, 4294901760
          %540 = vmatmul.f32.gmra.mxu0 %v539
          %v541 = vpop.f32.mrf.mxu0
          %v542 = vadd.f32 %v507, %v541
          %543 = vdwg.mxu0
          %544 = vmatpush.msra.mxu0 0.0
          %545 = vmatpush.msra.mxu0 0.0
          %546 = vmatpush.msra.mxu0 0.0
          %547 = vmatpush.msra.mxu0 0.0
          %548 = vmatpush.msra.mxu0 0.0
          %549 = vmatpush.msra.mxu0 0.0
          %550 = vmatpush.msra.mxu0 0.0
          %551 = vmatpush.msra.mxu0 0.0
          %552 = vmatpush.msra.mxu0 0.0
          %553 = vmatpush.msra.mxu0 0.0
          %554 = vmatpush.msra.mxu0 0.0
          %555 = vmatpush.msra.mxu0 0.0
          %556 = vmatpush.msra.mxu0 0.0
          %557 = vmatpush.msra.mxu0 0.0
          %v558 = vand.u32 %v472, 4294901760
          %v559 = vsub.f32 %v472, %v558
          %560 = vmatpush.msra.mxu0 %v559
          %v561 = vand.u32 %v457, 4294901760
          %v562 = vsub.f32 %v457, %v561
          %563 = vmatpush.msra.mxu0 %v562
          %v564 = vand.u32 %v465, 4294901760
          %v565 = vsub.f32 %v465, %v564
          %566 = vmatmul.f32.gmra.mxu0 %v565
          %v567 = vpop.f32.mrf.mxu0
          %v568 = vadd.f32 %v538, %v567
          %v569 = vand.u32 %v468, 4294901760
          %v570 = vsub.f32 %v468, %v569
          %571 = vmatmul.f32.gmra.mxu0 %v570
          %v572 = vpop.f32.mrf.mxu0
          %v573 = vadd.f32 %v542, %v572
          %574 = vdwg.mxu0
          %575 = vmatpush.msra.mxu0 0.0
          %576 = vmatpush.msra.mxu0 0.0
          %577 = vmatpush.msra.mxu0 0.0
          %578 = vmatpush.msra.mxu0 0.0
          %579 = vmatpush.msra.mxu0 0.0
          %580 = vmatpush.msra.mxu0 0.0
          %581 = vmatpush.msra.mxu0 0.0
          %582 = vmatpush.msra.mxu0 0.0
          %583 = vmatpush.msra.mxu0 0.0
          %584 = vmatpush.msra.mxu0 0.0
          %585 = vmatpush.msra.mxu0 0.0
          %586 = vmatpush.msra.mxu0 0.0
          %587 = vmatpush.msra.mxu0 0.0
          %588 = vmatpush.msra.mxu0 0.0
          %v589 = vand.u32 %v472, 4294901760
          %590 = vmatpush.msra.mxu0 %v589
          %v591 = vand.u32 %v457, 4294901760
          %592 = vmatpush.msra.mxu0 %v591
          %v593 = vand.u32 %v465, 4294901760
          %v594 = vsub.f32 %v465, %v593
          %v595 = vand.u32 %v594, 4294901760
          %596 = vmatmul.f32.gmra.mxu0 %v595
          %v597 = vpop.f32.mrf.mxu0
          %v598 = vadd.f32 %v568, %v597
          %v599 = vand.u32 %v468, 4294901760
          %v600 = vsub.f32 %v468, %v599
          %v601 = vand.u32 %v600, 4294901760
          %602 = vmatmul.f32.gmra.mxu0 %v601
          %v603 = vpop.f32.mrf.mxu0
          %v604 = vadd.f32 %v573, %v603
          %605 = vdwg.mxu0
          %606 = vmatpush.msra.mxu0 0.0
          %607 = vmatpush.msra.mxu0 0.0
          %608 = vmatpush.msra.mxu0 0.0
          %609 = vmatpush.msra.mxu0 0.0
          %610 = vmatpush.msra.mxu0 0.0
          %611 = vmatpush.msra.mxu0 0.0
          %612 = vmatpush.msra.mxu0 0.0
          %613 = vmatpush.msra.mxu0 0.0
          %614 = vmatpush.msra.mxu0 0.0
          %615 = vmatpush.msra.mxu0 0.0
          %616 = vmatpush.msra.mxu0 0.0
          %617 = vmatpush.msra.mxu0 0.0
          %618 = vmatpush.msra.mxu0 0.0
          %619 = vmatpush.msra.mxu0 0.0
          %v620 = vand.u32 %v472, 4294901760
          %v621 = vsub.f32 %v472, %v620
          %v622 = vand.u32 %v621, 4294901760
          %623 = vmatpush.msra.mxu0 %v622
          %v624 = vand.u32 %v457, 4294901760
          %v625 = vsub.f32 %v457, %v624
          %v626 = vand.u32 %v625, 4294901760
          %627 = vmatpush.msra.mxu0 %v626
          %v628 = vand.u32 %v465, 4294901760
          %629 = vmatmul.f32.gmra.mxu0 %v628
          %v630 = vpop.f32.mrf.mxu0
          %v631 = vadd.f32 %v598, %v630
          %v632 = vand.u32 %v468, 4294901760
          %633 = vmatmul.f32.gmra.mxu0 %v632
          %v634 = vpop.f32.mrf.mxu0
          %v635 = vadd.f32 %v604, %v634
          %636 = vdwg.mxu0
          %637 = vmatpush.msra.mxu0 0.0
          %638 = vmatpush.msra.mxu0 0.0
          %639 = vmatpush.msra.mxu0 0.0
          %640 = vmatpush.msra.mxu0 0.0
          %641 = vmatpush.msra.mxu0 0.0
          %642 = vmatpush.msra.mxu0 0.0
          %643 = vmatpush.msra.mxu0 0.0
          %644 = vmatpush.msra.mxu0 0.0
          %645 = vmatpush.msra.mxu0 0.0
          %646 = vmatpush.msra.mxu0 0.0
          %647 = vmatpush.msra.mxu0 0.0
          %648 = vmatpush.msra.mxu0 0.0
          %649 = vmatpush.msra.mxu0 0.0
          %650 = vmatpush.msra.mxu0 0.0
          %v651 = vand.u32 %v472, 4294901760
          %652 = vmatpush.msra.mxu0 %v651
          %v653 = vand.u32 %v457, 4294901760
          %654 = vmatpush.msra.mxu0 %v653
          %v655 = vand.u32 %v465, 4294901760
          %656 = vmatmul.f32.gmra.mxu0 %v655
          %v657 = vpop.f32.mrf.mxu0
          %v658 = vadd.f32 %v631, %v657
          %v659 = vand.u32 %v468, 4294901760
          %660 = vmatmul.f32.gmra.mxu0 %v659
          %v661 = vpop.f32.mrf.mxu0
          %v662 = vadd.f32 %v635, %v661
          %663 = vdwg.mxu0
          %v664 = vld [vmem:[#allocation6] sm:$0xff]
          %v665 = vld [vmem:[#allocation6 + $0x8] sm:$0xff]
          %v666 = vld [vmem:[#allocation6 + $0x10] sm:$0xff]
          %v667 = vld [vmem:[#allocation6 + $0x18] sm:$0xff]
          %v668 = vld [vmem:[#allocation6 + $0x20] sm:$0xff]
          %v669 = vld [vmem:[#allocation6 + $0x28] sm:$0xff]
          %v670 = vld [vmem:[#allocation6 + $0x30] sm:$0xff]
          %v671 = vld [vmem:[#allocation6 + $0x38] sm:$0xff]
          %v672 = vld [vmem:[#allocation6 + $0x40] sm:$0xff]
          %v673 = vld [vmem:[#allocation6 + $0x48] sm:$0xff]
          %v674 = vld [vmem:[#allocation6 + $0x50] sm:$0xff]
          %v675 = vld [vmem:[#allocation6 + $0x58] sm:$0xff]
          %v676 = vld [vmem:[#allocation6 + $0x60] sm:$0xff]
          %v677 = vld [vmem:[#allocation6 + $0x68] sm:$0xff]
          %v678 = vld [vmem:[#allocation6 + $0x70] sm:$0xff]
          %v679 = vld [vmem:[#allocation6 + $0x78] sm:$0xff]
          %v680 = vand.u32 %v679, 4294901760
          %681 = vmatpush.msra.mxu0 %v680
          %v682 = vand.u32 %v678, 4294901760
          %683 = vmatpush.msra.mxu0 %v682
          %v684 = vand.u32 %v677, 4294901760
          %685 = vmatpush.msra.mxu0 %v684
          %v686 = vand.u32 %v676, 4294901760
          %687 = vmatpush.msra.mxu0 %v686
          %v688 = vand.u32 %v675, 4294901760
          %689 = vmatpush.msra.mxu0 %v688
          %v690 = vand.u32 %v674, 4294901760
          %691 = vmatpush.msra.mxu0 %v690
          %v692 = vand.u32 %v673, 4294901760
          %693 = vmatpush.msra.mxu0 %v692
          %v694 = vand.u32 %v672, 4294901760
          %695 = vmatpush.msra.mxu0 %v694
          %v696 = vand.u32 %v671, 4294901760
          %697 = vmatpush.msra.mxu0 %v696
          %v698 = vand.u32 %v670, 4294901760
          %699 = vmatpush.msra.mxu0 %v698
          %v700 = vand.u32 %v669, 4294901760
          %701 = vmatpush.msra.mxu0 %v700
          %v702 = vand.u32 %v668, 4294901760
          %703 = vmatpush.msra.mxu0 %v702
          %v704 = vand.u32 %v667, 4294901760
          %705 = vmatpush.msra.mxu0 %v704
          %v706 = vand.u32 %v666, 4294901760
          %707 = vmatpush.msra.mxu0 %v706
          %v708 = vand.u32 %v665, 4294901760
          %709 = vmatpush.msra.mxu0 %v708
          %v710 = vand.u32 %v664, 4294901760
          %711 = vmatpush.msra.mxu0 %v710
          %v712 = vand.u32 %v658, 4294901760
          %v713 = vsub.f32 %v658, %v712
          %v714 = vand.u32 %v713, 4294901760
          %v715 = vsub.f32 %v713, %v714
          %v716 = vand.u32 %v715, 4294901760
          %717 = vmatmul.f32.gmra.mxu0 %v716
          %v718 = vpop.f32.mrf.mxu0
          %v719 = vadd.f32 0.0, %v718
          %v720 = vand.u32 %v662, 4294901760
          %v721 = vsub.f32 %v662, %v720
          %v722 = vand.u32 %v721, 4294901760
          %v723 = vsub.f32 %v721, %v722
          %v724 = vand.u32 %v723, 4294901760
          %725 = vmatmul.f32.gmra.mxu0 %v724
          %v726 = vpop.f32.mrf.mxu0
          %v727 = vadd.f32 0.0, %v726
          %728 = vdwg.mxu0
          %v729 = vand.u32 %v679, 4294901760
          %v730 = vsub.f32 %v679, %v729
          %v731 = vand.u32 %v730, 4294901760
          %v732 = vsub.f32 %v730, %v731
          %v733 = vand.u32 %v732, 4294901760
          %734 = vmatpush.msra.mxu0 %v733
          %v735 = vand.u32 %v678, 4294901760
          %v736 = vsub.f32 %v678, %v735
          %v737 = vand.u32 %v736, 4294901760
          %v738 = vsub.f32 %v736, %v737
          %v739 = vand.u32 %v738, 4294901760
          %740 = vmatpush.msra.mxu0 %v739
          %v741 = vand.u32 %v677, 4294901760
          %v742 = vsub.f32 %v677, %v741
          %v743 = vand.u32 %v742, 4294901760
          %v744 = vsub.f32 %v742, %v743
          %v745 = vand.u32 %v744, 4294901760
          %746 = vmatpush.msra.mxu0 %v745
          %v747 = vand.u32 %v676, 4294901760
          %v748 = vsub.f32 %v676, %v747
          %v749 = vand.u32 %v748, 4294901760
          %v750 = vsub.f32 %v748, %v749
          %v751 = vand.u32 %v750, 4294901760
          %752 = vmatpush.msra.mxu0 %v751
          %v753 = vand.u32 %v675, 4294901760
          %v754 = vsub.f32 %v675, %v753
          %v755 = vand.u32 %v754, 4294901760
          %v756 = vsub.f32 %v754, %v755
          %v757 = vand.u32 %v756, 4294901760
          %758 = vmatpush.msra.mxu0 %v757
          %v759 = vand.u32 %v674, 4294901760
          %v760 = vsub.f32 %v674, %v759
          %v761 = vand.u32 %v760, 4294901760
          %v762 = vsub.f32 %v760, %v761
          %v763 = vand.u32 %v762, 4294901760
          %764 = vmatpush.msra.mxu0 %v763
          %v765 = vand.u32 %v673, 4294901760
          %v766 = vsub.f32 %v673, %v765
          %v767 = vand.u32 %v766, 4294901760
          %v768 = vsub.f32 %v766, %v767
          %v769 = vand.u32 %v768, 4294901760
          %770 = vmatpush.msra.mxu0 %v769
          %v771 = vand.u32 %v672, 4294901760
          %v772 = vsub.f32 %v672, %v771
          %v773 = vand.u32 %v772, 4294901760
          %v774 = vsub.f32 %v772, %v773
          %v775 = vand.u32 %v774, 4294901760
          %776 = vmatpush.msra.mxu0 %v775
          %v777 = vand.u32 %v671, 4294901760
          %v778 = vsub.f32 %v671, %v777
          %v779 = vand.u32 %v778, 4294901760
          %v780 = vsub.f32 %v778, %v779
          %v781 = vand.u32 %v780, 4294901760
          %782 = vmatpush.msra.mxu0 %v781
          %v783 = vand.u32 %v670, 4294901760
          %v784 = vsub.f32 %v670, %v783
          %v785 = vand.u32 %v784, 4294901760
          %v786 = vsub.f32 %v784, %v785
          %v787 = vand.u32 %v786, 4294901760
          %788 = vmatpush.msra.mxu0 %v787
          %v789 = vand.u32 %v669, 4294901760
          %v790 = vsub.f32 %v669, %v789
          %v791 = vand.u32 %v790, 4294901760
          %v792 = vsub.f32 %v790, %v791
          %v793 = vand.u32 %v792, 4294901760
          %794 = vmatpush.msra.mxu0 %v793
          %v795 = vand.u32 %v668, 4294901760
          %v796 = vsub.f32 %v668, %v795
          %v797 = vand.u32 %v796, 4294901760
          %v798 = vsub.f32 %v796, %v797
          %v799 = vand.u32 %v798, 4294901760
          %800 = vmatpush.msra.mxu0 %v799
          %v801 = vand.u32 %v667, 4294901760
          %v802 = vsub.f32 %v667, %v801
          %v803 = vand.u32 %v802, 4294901760
          %v804 = vsub.f32 %v802, %v803
          %v805 = vand.u32 %v804, 4294901760
          %806 = vmatpush.msra.mxu0 %v805
          %v807 = vand.u32 %v666, 4294901760
          %v808 = vsub.f32 %v666, %v807
          %v809 = vand.u32 %v808, 4294901760
          %v810 = vsub.f32 %v808, %v809
          %v811 = vand.u32 %v810, 4294901760
          %812 = vmatpush.msra.mxu0 %v811
          %v813 = vand.u32 %v665, 4294901760
          %v814 = vsub.f32 %v665, %v813
          %v815 = vand.u32 %v814, 4294901760
          %v816 = vsub.f32 %v814, %v815
          %v817 = vand.u32 %v816, 4294901760
          %818 = vmatpush.msra.mxu0 %v817
          %v819 = vand.u32 %v664, 4294901760
          %v820 = vsub.f32 %v664, %v819
          %v821 = vand.u32 %v820, 4294901760
          %v822 = vsub.f32 %v820, %v821
          %v823 = vand.u32 %v822, 4294901760
          %824 = vmatpush.msra.mxu0 %v823
          %v825 = vand.u32 %v658, 4294901760
          %826 = vmatmul.f32.gmra.mxu0 %v825
          %v827 = vpop.f32.mrf.mxu0
          %v828 = vadd.f32 %v719, %v827
          %v829 = vand.u32 %v662, 4294901760
          %830 = vmatmul.f32.gmra.mxu0 %v829
          %v831 = vpop.f32.mrf.mxu0
          %v832 = vadd.f32 %v727, %v831
          %833 = vdwg.mxu0
          %v834 = vand.u32 %v679, 4294901760
          %v835 = vsub.f32 %v679, %v834
          %836 = vmatpush.msra.mxu0 %v835
          %v837 = vand.u32 %v678, 4294901760
          %v838 = vsub.f32 %v678, %v837
          %839 = vmatpush.msra.mxu0 %v838
          %v840 = vand.u32 %v677, 4294901760
          %v841 = vsub.f32 %v677, %v840
          %842 = vmatpush.msra.mxu0 %v841
          %v843 = vand.u32 %v676, 4294901760
          %v844 = vsub.f32 %v676, %v843
          %845 = vmatpush.msra.mxu0 %v844
          %v846 = vand.u32 %v675, 4294901760
          %v847 = vsub.f32 %v675, %v846
          %848 = vmatpush.msra.mxu0 %v847
          %v849 = vand.u32 %v674, 4294901760
          %v850 = vsub.f32 %v674, %v849
          %851 = vmatpush.msra.mxu0 %v850
          %v852 = vand.u32 %v673, 4294901760
          %v853 = vsub.f32 %v673, %v852
          %854 = vmatpush.msra.mxu0 %v853
          %v855 = vand.u32 %v672, 4294901760
          %v856 = vsub.f32 %v672, %v855
          %857 = vmatpush.msra.mxu0 %v856
          %v858 = vand.u32 %v671, 4294901760
          %v859 = vsub.f32 %v671, %v858
          %860 = vmatpush.msra.mxu0 %v859
          %v861 = vand.u32 %v670, 4294901760
          %v862 = vsub.f32 %v670, %v861
          %863 = vmatpush.msra.mxu0 %v862
          %v864 = vand.u32 %v669, 4294901760
          %v865 = vsub.f32 %v669, %v864
          %866 = vmatpush.msra.mxu0 %v865
          %v867 = vand.u32 %v668, 4294901760
          %v868 = vsub.f32 %v668, %v867
          %869 = vmatpush.msra.mxu0 %v868
          %v870 = vand.u32 %v667, 4294901760
          %v871 = vsub.f32 %v667, %v870
          %872 = vmatpush.msra.mxu0 %v871
          %v873 = vand.u32 %v666, 4294901760
          %v874 = vsub.f32 %v666, %v873
          %875 = vmatpush.msra.mxu0 %v874
          %v876 = vand.u32 %v665, 4294901760
          %v877 = vsub.f32 %v665, %v876
          %878 = vmatpush.msra.mxu0 %v877
          %v879 = vand.u32 %v664, 4294901760
          %v880 = vsub.f32 %v664, %v879
          %881 = vmatpush.msra.mxu0 %v880
          %v882 = vand.u32 %v658, 4294901760
          %v883 = vsub.f32 %v658, %v882
          %884 = vmatmul.f32.gmra.mxu0 %v883
          %v885 = vpop.f32.mrf.mxu0
          %v886 = vadd.f32 %v828, %v885
          %v887 = vand.u32 %v662, 4294901760
          %v888 = vsub.f32 %v662, %v887
          %889 = vmatmul.f32.gmra.mxu0 %v888
          %v890 = vpop.f32.mrf.mxu0
          %v891 = vadd.f32 %v832, %v890
          %892 = vdwg.mxu0
          %v893 = vand.u32 %v679, 4294901760
          %894 = vmatpush.msra.mxu0 %v893
          %v895 = vand.u32 %v678, 4294901760
          %896 = vmatpush.msra.mxu0 %v895
          %v897 = vand.u32 %v677, 4294901760
          %898 = vmatpush.msra.mxu0 %v897
          %v899 = vand.u32 %v676, 4294901760
          %900 = vmatpush.msra.mxu0 %v899
          %v901 = vand.u32 %v675, 4294901760
          %902 = vmatpush.msra.mxu0 %v901
          %v903 = vand.u32 %v674, 4294901760
          %904 = vmatpush.msra.mxu0 %v903
          %v905 = vand.u32 %v673, 4294901760
          %906 = vmatpush.msra.mxu0 %v905
          %v907 = vand.u32 %v672, 4294901760
          %908 = vmatpush.msra.mxu0 %v907
          %v909 = vand.u32 %v671, 4294901760
          %910 = vmatpush.msra.mxu0 %v909
          %v911 = vand.u32 %v670, 4294901760
          %912 = vmatpush.msra.mxu0 %v911
          %v913 = vand.u32 %v669, 4294901760
          %914 = vmatpush.msra.mxu0 %v913
          %v915 = vand.u32 %v668, 4294901760
          %916 = vmatpush.msra.mxu0 %v915
          %v917 = vand.u32 %v667, 4294901760
          %918 = vmatpush.msra.mxu0 %v917
          %v919 = vand.u32 %v666, 4294901760
          %920 = vmatpush.msra.mxu0 %v919
          %v921 = vand.u32 %v665, 4294901760
          %922 = vmatpush.msra.mxu0 %v921
          %v923 = vand.u32 %v664, 4294901760
          %924 = vmatpush.msra.mxu0 %v923
          %v925 = vand.u32 %v658, 4294901760
          %v926 = vsub.f32 %v658, %v925
          %v927 = vand.u32 %v926, 4294901760
          %928 = vmatmul.f32.gmra.mxu0 %v927
          %v929 = vpop.f32.mrf.mxu0
          %v930 = vadd.f32 %v886, %v929
          %v931 = vand.u32 %v662, 4294901760
          %v932 = vsub.f32 %v662, %v931
          %v933 = vand.u32 %v932, 4294901760
          %934 = vmatmul.f32.gmra.mxu0 %v933
          %v935 = vpop.f32.mrf.mxu0
          %v936 = vadd.f32 %v891, %v935
          %937 = vdwg.mxu0
          %v938 = vand.u32 %v679, 4294901760
          %v939 = vsub.f32 %v679, %v938
          %v940 = vand.u32 %v939, 4294901760
          %941 = vmatpush.msra.mxu0 %v940
          %v942 = vand.u32 %v678, 4294901760
          %v943 = vsub.f32 %v678, %v942
          %v944 = vand.u32 %v943, 4294901760
          %945 = vmatpush.msra.mxu0 %v944
          %v946 = vand.u32 %v677, 4294901760
          %v947 = vsub.f32 %v677, %v946
          %v948 = vand.u32 %v947, 4294901760
          %949 = vmatpush.msra.mxu0 %v948
          %v950 = vand.u32 %v676, 4294901760
          %v951 = vsub.f32 %v676, %v950
          %v952 = vand.u32 %v951, 4294901760
          %953 = vmatpush.msra.mxu0 %v952
          %v954 = vand.u32 %v675, 4294901760
          %v955 = vsub.f32 %v675, %v954
          %v956 = vand.u32 %v955, 4294901760
          %957 = vmatpush.msra.mxu0 %v956
          %v958 = vand.u32 %v674, 4294901760
          %v959 = vsub.f32 %v674, %v958
          %v960 = vand.u32 %v959, 4294901760
          %961 = vmatpush.msra.mxu0 %v960
          %v962 = vand.u32 %v673, 4294901760
          %v963 = vsub.f32 %v673, %v962
          %v964 = vand.u32 %v963, 4294901760
          %965 = vmatpush.msra.mxu0 %v964
          %v966 = vand.u32 %v672, 4294901760
          %v967 = vsub.f32 %v672, %v966
          %v968 = vand.u32 %v967, 4294901760
          %969 = vmatpush.msra.mxu0 %v968
          %v970 = vand.u32 %v671, 4294901760
          %v971 = vsub.f32 %v671, %v970
          %v972 = vand.u32 %v971, 4294901760
          %973 = vmatpush.msra.mxu0 %v972
          %v974 = vand.u32 %v670, 4294901760
          %v975 = vsub.f32 %v670, %v974
          %v976 = vand.u32 %v975, 4294901760
          %977 = vmatpush.msra.mxu0 %v976
          %v978 = vand.u32 %v669, 4294901760
          %v979 = vsub.f32 %v669, %v978
          %v980 = vand.u32 %v979, 4294901760
          %981 = vmatpush.msra.mxu0 %v980
          %v982 = vand.u32 %v668, 4294901760
          %v983 = vsub.f32 %v668, %v982
          %v984 = vand.u32 %v983, 4294901760
          %985 = vmatpush.msra.mxu0 %v984
          %v986 = vand.u32 %v667, 4294901760
          %v987 = vsub.f32 %v667, %v986
          %v988 = vand.u32 %v987, 4294901760
          %989 = vmatpush.msra.mxu0 %v988
          %v990 = vand.u32 %v666, 4294901760
          %v991 = vsub.f32 %v666, %v990
          %v992 = vand.u32 %v991, 4294901760
          %993 = vmatpush.msra.mxu0 %v992
          %v994 = vand.u32 %v665, 4294901760
          %v995 = vsub.f32 %v665, %v994
          %v996 = vand.u32 %v995, 4294901760
          %997 = vmatpush.msra.mxu0 %v996
          %v998 = vand.u32 %v664, 4294901760
          %v999 = vsub.f32 %v664, %v998
          %v1000 = vand.u32 %v999, 4294901760
          %1001 = vmatpush.msra.mxu0 %v1000
          %v1002 = vand.u32 %v658, 4294901760
          %1003 = vmatmul.f32.gmra.mxu0 %v1002
          %v1004 = vpop.f32.mrf.mxu0
          %v1005 = vadd.f32 %v930, %v1004
          %v1006 = vand.u32 %v662, 4294901760
          %1007 = vmatmul.f32.gmra.mxu0 %v1006
          %v1008 = vpop.f32.mrf.mxu0
          %v1009 = vadd.f32 %v936, %v1008
          %1010 = vdwg.mxu0
          %v1011 = vand.u32 %v679, 4294901760
          %1012 = vmatpush.msra.mxu0 %v1011
          %v1013 = vand.u32 %v678, 4294901760
          %1014 = vmatpush.msra.mxu0 %v1013
          %v1015 = vand.u32 %v677, 4294901760
          %1016 = vmatpush.msra.mxu0 %v1015
          %v1017 = vand.u32 %v676, 4294901760
          %1018 = vmatpush.msra.mxu0 %v1017
          %v1019 = vand.u32 %v675, 4294901760
          %1020 = vmatpush.msra.mxu0 %v1019
          %v1021 = vand.u32 %v674, 4294901760
          %1022 = vmatpush.msra.mxu0 %v1021
          %v1023 = vand.u32 %v673, 4294901760
          %1024 = vmatpush.msra.mxu0 %v1023
          %v1025 = vand.u32 %v672, 4294901760
          %1026 = vmatpush.msra.mxu0 %v1025
          %v1027 = vand.u32 %v671, 4294901760
          %1028 = vmatpush.msra.mxu0 %v1027
          %v1029 = vand.u32 %v670, 4294901760
          %1030 = vmatpush.msra.mxu0 %v1029
          %v1031 = vand.u32 %v669, 4294901760
          %1032 = vmatpush.msra.mxu0 %v1031
          %v1033 = vand.u32 %v668, 4294901760
          %1034 = vmatpush.msra.mxu0 %v1033
          %v1035 = vand.u32 %v667, 4294901760
          %1036 = vmatpush.msra.mxu0 %v1035
          %v1037 = vand.u32 %v666, 4294901760
          %1038 = vmatpush.msra.mxu0 %v1037
          %v1039 = vand.u32 %v665, 4294901760
          %1040 = vmatpush.msra.mxu0 %v1039
          %v1041 = vand.u32 %v664, 4294901760
          %1042 = vmatpush.msra.mxu0 %v1041
          %v1043 = vand.u32 %v658, 4294901760
          %1044 = vmatmul.f32.gmra.mxu0 %v1043
          %v1045 = vpop.f32.mrf.mxu0
          %v1046 = vadd.f32 %v1005, %v1045
          %v1047 = vand.u32 %v662, 4294901760
          %1048 = vmatmul.f32.gmra.mxu0 %v1047
          %v1049 = vpop.f32.mrf.mxu0
          %v1050 = vadd.f32 %v1009, %v1049
          %1051 = vdwg.mxu0
          %vm1052 = vcmp.gt.f32.partialorder %v1046, 0.0
          %vm1053 = vcmp.gt.f32.partialorder %v1050, 0.0
          %v1054 = vmul.f32 %v1046, 0.2
          %v1055 = vmul.f32 %v1050, 0.2
          %v1056 = vsel %vm1052, %v1046, %v1054
          %v1057 = vsel %vm1053, %v1050, %v1055
          %v1058 = vmul.f32 %v658, %v1056
          %v1059 = vmul.f32 %v662, %v1057
          %v1060 = vld [vmem:[%s435] sm:$0xff]
          %v1061 = vld [vmem:[%s435 + $0x8] sm:$0xff]
          %s1062 = smul.u32 %s42, 8
          %v1063 = vstv %s1062
          %v1064 = vsub.s32 %v1060, %v1063
          %v1065 = vsub.s32 %v1061, %v1063
          %vm1066 = vcmp.eq.s32.totalorder %v1064, 0
          %vm1067 = vcmp.eq.s32.totalorder %v1065, 0
          %v1068 = vsel %vm1066, 1, 0
          %v1069 = vsel %vm1067, 1, 0
          %1070 = vset.pattern.permute.xlu0 0
          %1071 = vperm.xlu0 %1070, %v1068
          %v1072 = vpop.permute.xlu0 %1071
          %1073 = vset.pattern.permute.xlu0 0
          %1074 = vperm.xlu0 %1073, %v1069
          %v1075 = vpop.permute.xlu0 %1074
          %vm1076 = vcmp.eq.s32.totalorder %v1072, 1
          %vm1077 = vcmp.eq.s32.totalorder %v1075, 1
          %v1078 = vsel %vm1076, %v1058, -inf
          %v1079 = vsel %vm1077, %v1059, -inf
          %v1080 = vmax.f32 %v1078, %v1079
          %v1081 = vrot.slane %v1080, 4
          %v1082 = vmax.f32 %v1080, %v1081
          %v1083 = vrot.slane %v1082, 2
          %v1084 = vmax.f32 %v1082, %v1083
          %v1085 = vrot.slane %v1084, 1
          %v1086 = vmax.f32 %v1084, %v1085
          %vm1087 = vcmp.eq.s32.totalorder %v1064, 1
          %vm1088 = vcmp.eq.s32.totalorder %v1065, 1
          %v1089 = vsel %vm1087, 1, 0
          %v1090 = vsel %vm1088, 1, 0
          %1091 = vset.pattern.permute.xlu0 0
          %1092 = vperm.xlu0 %1091, %v1089
          %v1093 = vpop.permute.xlu0 %1092
          %1094 = vset.pattern.permute.xlu0 0
          %1095 = vperm.xlu0 %1094, %v1090
          %v1096 = vpop.permute.xlu0 %1095
          %vm1097 = vcmp.eq.s32.totalorder %v1093, 1
          %vm1098 = vcmp.eq.s32.totalorder %v1096, 1
          %v1099 = vsel %vm1097, %v1058, -inf
          %v1100 = vsel %vm1098, %v1059, -inf
          %v1101 = vmax.f32 %v1099, %v1100
          %v1102 = vrot.slane %v1101, 4
          %v1103 = vmax.f32 %v1101, %v1102
          %v1104 = vrot.slane %v1103, 2
          %v1105 = vmax.f32 %v1103, %v1104
          %v1106 = vrot.slane %v1105, 1
          %v1107 = vmax.f32 %v1105, %v1106
          %vm1108 = vcmp.eq.s32.totalorder %v1064, 2
          %vm1109 = vcmp.eq.s32.totalorder %v1065, 2
          %v1110 = vsel %vm1108, 1, 0
          %v1111 = vsel %vm1109, 1, 0
          %1112 = vset.pattern.permute.xlu0 0
          %1113 = vperm.xlu0 %1112, %v1110
          %v1114 = vpop.permute.xlu0 %1113
          %1115 = vset.pattern.permute.xlu0 0
          %1116 = vperm.xlu0 %1115, %v1111
          %v1117 = vpop.permute.xlu0 %1116
          %vm1118 = vcmp.eq.s32.totalorder %v1114, 1
          %vm1119 = vcmp.eq.s32.totalorder %v1117, 1
          %v1120 = vsel %vm1118, %v1058, -inf
          %v1121 = vsel %vm1119, %v1059, -inf
          %v1122 = vmax.f32 %v1120, %v1121
          %v1123 = vrot.slane %v1122, 4
          %v1124 = vmax.f32 %v1122, %v1123
          %v1125 = vrot.slane %v1124, 2
          %v1126 = vmax.f32 %v1124, %v1125
          %v1127 = vrot.slane %v1126, 1
          %v1128 = vmax.f32 %v1126, %v1127
          %vm1129 = vcmp.eq.s32.totalorder %v1064, 3
          %vm1130 = vcmp.eq.s32.totalorder %v1065, 3
          %v1131 = vsel %vm1129, 1, 0
          %v1132 = vsel %vm1130, 1, 0
          %1133 = vset.pattern.permute.xlu0 0
          %1134 = vperm.xlu0 %1133, %v1131
          %v1135 = vpop.permute.xlu0 %1134
          %1136 = vset.pattern.permute.xlu0 0
          %1137 = vperm.xlu0 %1136, %v1132
          %v1138 = vpop.permute.xlu0 %1137
          %vm1139 = vcmp.eq.s32.totalorder %v1135, 1
          %vm1140 = vcmp.eq.s32.totalorder %v1138, 1
          %v1141 = vsel %vm1139, %v1058, -inf
          %v1142 = vsel %vm1140, %v1059, -inf
          %v1143 = vmax.f32 %v1141, %v1142
          %v1144 = vrot.slane %v1143, 4
          %v1145 = vmax.f32 %v1143, %v1144
          %v1146 = vrot.slane %v1145, 2
          %v1147 = vmax.f32 %v1145, %v1146
          %v1148 = vrot.slane %v1147, 1
          %v1149 = vmax.f32 %v1147, %v1148
          %vm1150 = vcmp.eq.s32.totalorder %v1064, 4
          %vm1151 = vcmp.eq.s32.totalorder %v1065, 4
          %v1152 = vsel %vm1150, 1, 0
          %v1153 = vsel %vm1151, 1, 0
          %1154 = vset.pattern.permute.xlu0 0
          %1155 = vperm.xlu0 %1154, %v1152
          %v1156 = vpop.permute.xlu0 %1155
          %1157 = vset.pattern.permute.xlu0 0
          %1158 = vperm.xlu0 %1157, %v1153
          %v1159 = vpop.permute.xlu0 %1158
          %vm1160 = vcmp.eq.s32.totalorder %v1156, 1
          %vm1161 = vcmp.eq.s32.totalorder %v1159, 1
          %v1162 = vsel %vm1160, %v1058, -inf
          %v1163 = vsel %vm1161, %v1059, -inf
          %v1164 = vmax.f32 %v1162, %v1163
          %v1165 = vrot.slane %v1164, 4
          %v1166 = vmax.f32 %v1164, %v1165
          %v1167 = vrot.slane %v1166, 2
          %v1168 = vmax.f32 %v1166, %v1167
          %v1169 = vrot.slane %v1168, 1
          %v1170 = vmax.f32 %v1168, %v1169
          %vm1171 = vcmp.eq.s32.totalorder %v1064, 5
          %vm1172 = vcmp.eq.s32.totalorder %v1065, 5
          %v1173 = vsel %vm1171, 1, 0
          %v1174 = vsel %vm1172, 1, 0
          %1175 = vset.pattern.permute.xlu0 0
          %1176 = vperm.xlu0 %1175, %v1173
          %v1177 = vpop.permute.xlu0 %1176
          %1178 = vset.pattern.permute.xlu0 0
          %1179 = vperm.xlu0 %1178, %v1174
          %v1180 = vpop.permute.xlu0 %1179
          %vm1181 = vcmp.eq.s32.totalorder %v1177, 1
          %vm1182 = vcmp.eq.s32.totalorder %v1180, 1
          %v1183 = vsel %vm1181, %v1058, -inf
          %v1184 = vsel %vm1182, %v1059, -inf
          %v1185 = vmax.f32 %v1183, %v1184
          %v1186 = vrot.slane %v1185, 4
          %v1187 = vmax.f32 %v1185, %v1186
          %v1188 = vrot.slane %v1187, 2
          %v1189 = vmax.f32 %v1187, %v1188
          %v1190 = vrot.slane %v1189, 1
          %v1191 = vmax.f32 %v1189, %v1190
          %vm1192 = vcmp.eq.s32.totalorder %v1064, 6
          %vm1193 = vcmp.eq.s32.totalorder %v1065, 6
          %v1194 = vsel %vm1192, 1, 0
          %v1195 = vsel %vm1193, 1, 0
          %1196 = vset.pattern.permute.xlu0 0
          %1197 = vperm.xlu0 %1196, %v1194
          %v1198 = vpop.permute.xlu0 %1197
          %1199 = vset.pattern.permute.xlu0 0
          %1200 = vperm.xlu0 %1199, %v1195
          %v1201 = vpop.permute.xlu0 %1200
          %vm1202 = vcmp.eq.s32.totalorder %v1198, 1
          %vm1203 = vcmp.eq.s32.totalorder %v1201, 1
          %v1204 = vsel %vm1202, %v1058, -inf
          %v1205 = vsel %vm1203, %v1059, -inf
          %v1206 = vmax.f32 %v1204, %v1205
          %v1207 = vrot.slane %v1206, 4
          %v1208 = vmax.f32 %v1206, %v1207
          %v1209 = vrot.slane %v1208, 2
          %v1210 = vmax.f32 %v1208, %v1209
          %v1211 = vrot.slane %v1210, 1
          %v1212 = vmax.f32 %v1210, %v1211
          %vm1213 = vcmp.eq.s32.totalorder %v1064, 7
          %vm1214 = vcmp.eq.s32.totalorder %v1065, 7
          %v1215 = vsel %vm1213, 1, 0
          %v1216 = vsel %vm1214, 1, 0
          %1217 = vset.pattern.permute.xlu0 0
          %1218 = vperm.xlu0 %1217, %v1215
          %v1219 = vpop.permute.xlu0 %1218
          %1220 = vset.pattern.permute.xlu0 0
          %1221 = vperm.xlu0 %1220, %v1216
          %v1222 = vpop.permute.xlu0 %1221
          %vm1223 = vcmp.eq.s32.totalorder %v1219, 1
          %vm1224 = vcmp.eq.s32.totalorder %v1222, 1
          %v1225 = vsel %vm1223, %v1058, -inf
          %v1226 = vsel %vm1224, %v1059, -inf
          %v1227 = vmax.f32 %v1225, %v1226
          %v1228 = vrot.slane %v1227, 4
          %v1229 = vmax.f32 %v1227, %v1228
          %v1230 = vrot.slane %v1229, 2
          %v1231 = vmax.f32 %v1229, %v1230
          %v1232 = vrot.slane %v1231, 1
          %v1233 = vmax.f32 %v1231, %v1232
          %v1234 = vld [vmem:[#allocation2] sm:$0xff]
          %v1235 = vsel %vm470, %v1086, %v1107
          %vm1236 = vcmask 1041408
          %v1237 = vsel %vm1236, %v1235, %v1128
          %vm1238 = vcmask 1042432
          %v1239 = vsel %vm1238, %v1237, %v1149
          %vm1240 = vcmask 1043456
          %v1241 = vsel %vm1240, %v1239, %v1170
          %vm1242 = vcmask 1044480
          %v1243 = vsel %vm1242, %v1241, %v1191
          %vm1244 = vcmask 1045504
          %v1245 = vsel %vm1244, %v1243, %v1212
          %vm1246 = vcmask 1046528
          %v1247 = vsel %vm1246, %v1245, %v1233
          %v1248 = vmax.f32 %v1234, %v1247
          %1249 = vst [vmem:[#allocation2] sm:$0xff] %v1248
        $region64: #{tpu_custom_call.1} parent=51 // pred_fallthru
          _
        %p1250 = scmp.eq.s32.totalorder %s43, 1
        // Predicated region
        $region65: #{tpu_custom_call.1} parent=51 // pred_check
          %p1251 = pneg %p1250
        $region66: #{tpu_custom_call.1} parent=51 // pred_check_branch
          %1253 = sbr.rel (%p1251) target = $region68
        $region67: #{tpu_custom_call.1} parent=51 // pred_region
          %v1254 = vld [vmem:[#allocation2] sm:$0xff]
          %vm1255 = vcmp.eq.f32.partialorder %v1254, -inf
          %v1256 = vsel %vm1255, 0.0, %v1254
          %v1257 = vld [vmem:[%s444] sm:$0xff]
          %v1258 = vld [vmem:[%s8] sm:$0xff]
          %vm1259 = vcmask 64512
          %v1261 = vsel %vm1259, %v1257, 0
          %1263 = vmatpush.msra.mxu0 0.0
          %1264 = vmatpush.msra.mxu0 0.0
          %1265 = vmatpush.msra.mxu0 0.0
          %1266 = vmatpush.msra.mxu0 0.0
          %1267 = vmatpush.msra.mxu0 0.0
          %1268 = vmatpush.msra.mxu0 0.0
          %1269 = vmatpush.msra.mxu0 0.0
          %1270 = vmatpush.msra.mxu0 0.0
          %1271 = vmatpush.msra.mxu0 0.0
          %1272 = vmatpush.msra.mxu0 0.0
          %1273 = vmatpush.msra.mxu0 0.0
          %1274 = vmatpush.msra.mxu0 0.0
          %1275 = vmatpush.msra.mxu0 0.0
          %1276 = vmatpush.msra.mxu0 0.0
          %1277 = vmatpush.msra.mxu0 0.0
          %v1278 = vand.u32 %v1258, 4294901760
          %1279 = vmatpush.msra.mxu0 %v1278
          %v1280 = vand.u32 %v1261, 4294901760
          %v1281 = vsub.f32 %v1261, %v1280
          %v1282 = vand.u32 %v1281, 4294901760
          %v1283 = vsub.f32 %v1281, %v1282
          %v1284 = vand.u32 %v1283, 4294901760
          %1285 = vmatmul.f32.gmra.mxu0 %v1284
          %v1286 = vpop.f32.mrf.mxu0
          %v1287 = vadd.f32 0.0, %v1286
          %1288 = vdwg.mxu0
          %1289 = vmatpush.msra.mxu0 0.0
          %1290 = vmatpush.msra.mxu0 0.0
          %1291 = vmatpush.msra.mxu0 0.0
          %1292 = vmatpush.msra.mxu0 0.0
          %1293 = vmatpush.msra.mxu0 0.0
          %1294 = vmatpush.msra.mxu0 0.0
          %1295 = vmatpush.msra.mxu0 0.0
          %1296 = vmatpush.msra.mxu0 0.0
          %1297 = vmatpush.msra.mxu0 0.0
          %1298 = vmatpush.msra.mxu0 0.0
          %1299 = vmatpush.msra.mxu0 0.0
          %1300 = vmatpush.msra.mxu0 0.0
          %1301 = vmatpush.msra.mxu0 0.0
          %1302 = vmatpush.msra.mxu0 0.0
          %1303 = vmatpush.msra.mxu0 0.0
          %v1304 = vand.u32 %v1258, 4294901760
          %v1305 = vsub.f32 %v1258, %v1304
          %v1306 = vand.u32 %v1305, 4294901760
          %v1307 = vsub.f32 %v1305, %v1306
          %v1308 = vand.u32 %v1307, 4294901760
          %1309 = vmatpush.msra.mxu0 %v1308
          %v1310 = vand.u32 %v1261, 4294901760
          %1311 = vmatmul.f32.gmra.mxu0 %v1310
          %v1312 = vpop.f32.mrf.mxu0
          %v1313 = vadd.f32 %v1287, %v1312
          %1314 = vdwg.mxu0
          %1315 = vmatpush.msra.mxu0 0.0
          %1316 = vmatpush.msra.mxu0 0.0
          %1317 = vmatpush.msra.mxu0 0.0
          %1318 = vmatpush.msra.mxu0 0.0
          %1319 = vmatpush.msra.mxu0 0.0
          %1320 = vmatpush.msra.mxu0 0.0
          %1321 = vmatpush.msra.mxu0 0.0
          %1322 = vmatpush.msra.mxu0 0.0
          %1323 = vmatpush.msra.mxu0 0.0
          %1324 = vmatpush.msra.mxu0 0.0
          %1325 = vmatpush.msra.mxu0 0.0
          %1326 = vmatpush.msra.mxu0 0.0
          %1327 = vmatpush.msra.mxu0 0.0
          %1328 = vmatpush.msra.mxu0 0.0
          %1329 = vmatpush.msra.mxu0 0.0
          %v1330 = vand.u32 %v1258, 4294901760
          %v1331 = vsub.f32 %v1258, %v1330
          %1332 = vmatpush.msra.mxu0 %v1331
          %v1333 = vand.u32 %v1261, 4294901760
          %v1334 = vsub.f32 %v1261, %v1333
          %1335 = vmatmul.f32.gmra.mxu0 %v1334
          %v1336 = vpop.f32.mrf.mxu0
          %v1337 = vadd.f32 %v1313, %v1336
          %1338 = vdwg.mxu0
          %1339 = vmatpush.msra.mxu0 0.0
          %1340 = vmatpush.msra.mxu0 0.0
          %1341 = vmatpush.msra.mxu0 0.0
          %1342 = vmatpush.msra.mxu0 0.0
          %1343 = vmatpush.msra.mxu0 0.0
          %1344 = vmatpush.msra.mxu0 0.0
          %1345 = vmatpush.msra.mxu0 0.0
          %1346 = vmatpush.msra.mxu0 0.0
          %1347 = vmatpush.msra.mxu0 0.0
          %1348 = vmatpush.msra.mxu0 0.0
          %1349 = vmatpush.msra.mxu0 0.0
          %1350 = vmatpush.msra.mxu0 0.0
          %1351 = vmatpush.msra.mxu0 0.0
          %1352 = vmatpush.msra.mxu0 0.0
          %1353 = vmatpush.msra.mxu0 0.0
          %v1354 = vand.u32 %v1258, 4294901760
          %1355 = vmatpush.msra.mxu0 %v1354
          %v1356 = vand.u32 %v1261, 4294901760
          %v1357 = vsub.f32 %v1261, %v1356
          %v1358 = vand.u32 %v1357, 4294901760
          %1359 = vmatmul.f32.gmra.mxu0 %v1358
          %v1360 = vpop.f32.mrf.mxu0
          %v1361 = vadd.f32 %v1337, %v1360
          %1362 = vdwg.mxu0
          %1363 = vmatpush.msra.mxu0 0.0
          %1364 = vmatpush.msra.mxu0 0.0
          %1365 = vmatpush.msra.mxu0 0.0
          %1366 = vmatpush.msra.mxu0 0.0
          %1367 = vmatpush.msra.mxu0 0.0
          %1368 = vmatpush.msra.mxu0 0.0
          %1369 = vmatpush.msra.mxu0 0.0
          %1370 = vmatpush.msra.mxu0 0.0
          %1371 = vmatpush.msra.mxu0 0.0
          %1372 = vmatpush.msra.mxu0 0.0
          %1373 = vmatpush.msra.mxu0 0.0
          %1374 = vmatpush.msra.mxu0 0.0
          %1375 = vmatpush.msra.mxu0 0.0
          %1376 = vmatpush.msra.mxu0 0.0
          %1377 = vmatpush.msra.mxu0 0.0
          %v1378 = vand.u32 %v1258, 4294901760
          %v1379 = vsub.f32 %v1258, %v1378
          %v1380 = vand.u32 %v1379, 4294901760
          %1381 = vmatpush.msra.mxu0 %v1380
          %v1382 = vand.u32 %v1261, 4294901760
          %1383 = vmatmul.f32.gmra.mxu0 %v1382
          %v1384 = vpop.f32.mrf.mxu0
          %v1385 = vadd.f32 %v1361, %v1384
          %1386 = vdwg.mxu0
          %1387 = vmatpush.msra.mxu0 0.0
          %1388 = vmatpush.msra.mxu0 0.0
          %1389 = vmatpush.msra.mxu0 0.0
          %1390 = vmatpush.msra.mxu0 0.0
          %1391 = vmatpush.msra.mxu0 0.0
          %1392 = vmatpush.msra.mxu0 0.0
          %1393 = vmatpush.msra.mxu0 0.0
          %1394 = vmatpush.msra.mxu0 0.0
          %1395 = vmatpush.msra.mxu0 0.0
          %1396 = vmatpush.msra.mxu0 0.0
          %1397 = vmatpush.msra.mxu0 0.0
          %1398 = vmatpush.msra.mxu0 0.0
          %1399 = vmatpush.msra.mxu0 0.0
          %1400 = vmatpush.msra.mxu0 0.0
          %1401 = vmatpush.msra.mxu0 0.0
          %v1402 = vand.u32 %v1258, 4294901760
          %1403 = vmatpush.msra.mxu0 %v1402
          %v1404 = vand.u32 %v1261, 4294901760
          %1405 = vmatmul.f32.gmra.mxu0 %v1404
          %v1406 = vpop.f32.mrf.mxu0
          %v1407 = vadd.f32 %v1385, %v1406
          %1408 = vdwg.mxu0
          %v1409 = vadd.f32 %v1256, %v1407
          %v1410 = vld [vmem:[%s9] sm:$0x1]
          %v1412 = vperm.slane %v1410, 0
          %v1414 = vadd.f32 %v1409, %v1412
          %1415 = vst [vmem:[%s412] sm:$0xff] %v1414
        $region68: #{tpu_custom_call.1} parent=51 // pred_fallthru
          _
        %s1416 = sand.u32 %s257, 1
        %s1417 = scalar_lea.sflag [#allocation8], %s1416
        %s1418 = sand.u32 %s257, 1
        %s1419 = smul.addr %s1418, 8
        %s1420 = scalar_lea.vmem [#allocation9], %s1419
        // Predicated region
        $region69: #{tpu_custom_call.1} parent=51 // pred_check
          %p1421 = pneg %p267
        $region70: #{tpu_custom_call.1} parent=51 // pred_check_branch
          %1423 = sbr.rel (%p1421) target = $region72
        $region71: #{tpu_custom_call.1} parent=51 // pred_region
          %1425 = vsyncadd %s1417, 0
          %s1426 = smul.addr %s42, 8
          %s1427 = scalar_lea.hbm %s10, %s1426
          %s1429 = sshll.u32 %s1420, 4
          %s1430 = int_to_ptr.vmem [resolvable:$true] %s1429
          %s1431 = sshll.u32 %s1427, 4
          %s1432 = int_to_ptr.hbm [resolvable:$true] %s1431
          %1434 = dma.vmem_to_hbm [thread:$0]  %s1430, 128, %s1432, %s1417
        $region72: #{tpu_custom_call.1} parent=51 // pred_fallthru
          _
      $region52: #{tpu_custom_call.1} parent=5 // pred_fallthru
        _
      %p1435 = scmp.le.s32.totalorder 2, %s33
      // Predicated region
      $region73: #{tpu_custom_call.1} parent=5 // pred_check
        %p1436 = pneg %p1435
      $region74: #{tpu_custom_call.1} parent=5 // pred_check_branch
        %1438 = sbr.rel (%p1436) target = $region76
      $region75: #{tpu_custom_call.1} parent=5 // pred_region
        %s1439 = ssub.s32 %s33, 2
        // Predicated region
        $region77: #{tpu_custom_call.1} parent=75 // pred_check
          %p1440 = pneg %p273
        $region78: #{tpu_custom_call.1} parent=75 // pred_check_branch
          %1442 = sbr.rel (%p1440) target = $region80
        $region79: #{tpu_custom_call.1} parent=75 // pred_region
          %s1443 = sand.u32 %s258, 1
          %s1444 = scalar_lea.sflag [#allocation8], %s1443
          %s1445 = sand.u32 %s258, 1
          %s1446 = smul.addr %s1445, 8
          %s1447 = scalar_lea.vmem [#allocation9], %s1446
          %1449 = dma.done %s1444, 128
        $region80: #{tpu_custom_call.1} parent=75 // pred_fallthru
          _
      $region76: #{tpu_custom_call.1} parent=5 // pred_fallthru
        _
    $region6: #{tpu_custom_call.1} parent=1 // loop_footer
      %s37 = sadd.s32 1, %s33
    $region7: #{tpu_custom_call.1} parent=1 // loop_footer_branch
      %32 = sbr.rel target = $region3
    $region8: #{tpu_custom_call.1} parent=1 // loop_exit
      _
    %1450 = vsyncpa [#allocation7], 1
    %s1451 = scalar_lea.sflag [#allocation7], 1
    %1452 = vsyncpa %s1451, 1
    %1453 = vsyncpa [#allocation8], 1
    %s1454 = scalar_lea.sflag [#allocation8], 1
    %1455 = vsyncpa %s1454, 1

</llo_original>
